<compile_context>
chip_gen: v7x
topology: tpu7x:2x2x1
jax: 0.10.0
libtpu: 0.0.40
codegen_flags: <defaults>
</compile_context>

<pallas_src>
import functools

import jax
import jax.numpy as jnp
import numpy as np
from jax import lax
from jax.experimental import pallas as pl
from jax.experimental.pallas import tpu as pltpu


def _lstm_value_kernel(ids_ref, emb_ref, wih_ref, whh_ref, b_ref,
                       wfc_ref, bfc_ref, out_ref, gx_sc,
                       *, seq_len, batch):
    """Single invocation.  ids_ref: (S*B, 1) time-major token ids."""
    H = whh_ref.shape[0]
    B = batch
    SB = seq_len * B
    V_pad = emb_ref.shape[0]

    # ---- Phase 1: fused embedding gather + input projection ----------------
    # one-hot(ids) @ emb_table  -> x (SB, E_pad);  x @ W_ih^T + bias -> gates.
    ids = ids_ref[...]                                            # (SB, 1) i32
    lane_iota = lax.broadcasted_iota(jnp.int32, (SB, V_pad), 1)
    onehot = (ids == lane_iota).astype(jnp.float32).astype(jnp.bfloat16)
    x = jnp.dot(onehot, emb_ref[...],
                preferred_element_type=jnp.float32)               # (SB, E_pad)
    gx_sc[...] = (jnp.dot(x.astype(jnp.bfloat16), wih_ref[...],
                          preferred_element_type=jnp.float32)
                  + b_ref[...])

    # ---- Phase 2: serial LSTM recurrence (PyTorch gate order [i, f, g, o]) -
    def step(t, carry):
        h, c = carry
        off = pl.multiple_of(t * B, B)             # sublane-aligned row offset
        gx_t = gx_sc[pl.ds(off, B), :]             # (B, 4H)
        gates = gx_t + jnp.dot(h.astype(jnp.bfloat16), whh_ref[...],
                               preferred_element_type=jnp.float32)
        i_g = jax.nn.sigmoid(gates[:, 0 * H:1 * H])
        f_g = jax.nn.sigmoid(gates[:, 1 * H:2 * H])
        g_g = jnp.tanh(gates[:, 2 * H:3 * H])
        o_g = jax.nn.sigmoid(gates[:, 3 * H:4 * H])
        c_new = f_g * c + i_g * g_g
        h_new = o_g * jnp.tanh(c_new)
        return (h_new, c_new)

    h0 = jnp.zeros((B, H), jnp.float32)
    c0 = jnp.zeros((B, H), jnp.float32)
    h_fin, _ = lax.fori_loop(0, seq_len, step, (h0, c0),
                             unroll=min(seq_len, 8))

    # ---- Phase 3: value head (O=1) on final hidden; VPU mul + lane reduce --
    val = jnp.sum(h_fin * wfc_ref[...], axis=-1, keepdims=True)  # (B, 1)
    out_ref[...] = jnp.broadcast_to(val, out_ref.shape) + bfc_ref[...]


@jax.jit
def simple_value_network(input_ids, params):
    B, S = input_ids.shape
    V, E = params["embedding"].shape
    H = params["w_hh"].shape[1]
    O = params["w_fc"].shape[0]
    assert O == 1, "value head implemented for output_dim=1 (module default)"

    LANE = 128
    SUB = 8
    B_pad = ((B + SUB - 1) // SUB) * SUB
    V_pad = ((V + LANE - 1) // LANE) * LANE
    E_pad = ((E + LANE - 1) // LANE) * LANE

    # Tiny int32 id column, time-major, batch padded with id 0 (sliced off).
    ids = jnp.transpose(input_ids.astype(jnp.int32), (1, 0))      # (S, B)
    if B_pad != B:
        ids = jnp.pad(ids, ((0, 0), (0, B_pad - B)))
    ids = ids.reshape(S * B_pad, 1)

    # bf16 MXU operands (zero-padded to full lanes); f32 bias / head weights.
    emb_pad = jnp.pad(params["embedding"],
                      ((0, V_pad - V), (0, E_pad - E))).astype(jnp.bfloat16)
    wih_t = jnp.pad(params["w_ih"].T,
                    ((0, E_pad - E), (0, 0))).astype(jnp.bfloat16)  # (E_pad,4H)
    whh_t = params["w_hh"].T.astype(jnp.bfloat16)                   # (H, 4H)
    bias = (params["b_ih"] + params["b_hh"])[None, :].astype(jnp.float32)
    wfc = params["w_fc"].astype(jnp.float32)                        # (1, H)
    bfc = jnp.broadcast_to(
        params["b_fc"].reshape(1, 1).astype(jnp.float32), (1, LANE))

    kernel = functools.partial(_lstm_value_kernel, seq_len=S, batch=B_pad)

    out = pl.pallas_call(
        kernel,
        out_shape=jax.ShapeDtypeStruct((B_pad, LANE), jnp.float32),
        grid_spec=pltpu.PrefetchScalarGridSpec(
            num_scalar_prefetch=0,
            grid=(1,),
            in_specs=[
                pl.BlockSpec((S * B_pad, 1), lambda i: (0, 0)),     # ids
                pl.BlockSpec((V_pad, E_pad), lambda i: (0, 0)),     # emb table
                pl.BlockSpec((E_pad, 4 * H), lambda i: (0, 0)),     # W_ih^T
                pl.BlockSpec((H, 4 * H), lambda i: (0, 0)),         # W_hh^T
                pl.BlockSpec((1, 4 * H), lambda i: (0, 0)),         # bias
                pl.BlockSpec((1, H), lambda i: (0, 0)),             # w_fc row
                pl.BlockSpec((1, LANE), lambda i: (0, 0)),          # b_fc row
            ],
            out_specs=pl.BlockSpec((B_pad, LANE), lambda i: (0, 0)),
            scratch_shapes=[
                pltpu.VMEM((S * B_pad, 4 * H), jnp.float32),        # gate proj
            ],
        ),
        compiler_params=pltpu.CompilerParams(
            dimension_semantics=("arbitrary",)),
    )(ids, emb_pad, wih_t, whh_t, bias, wfc, bfc)
    return out[:B, :O]


def reference_forward(input_ids, params):
    """Pure-JAX f32 reference replicating PyTorch semantics."""
    emb = params["embedding"][input_ids]              # (B, S, E)
    H = params["w_hh"].shape[1]
    B = emb.shape[0]

    def step(carry, x_t):
        h, c = carry
        gates = (x_t @ params["w_ih"].T + params["b_ih"]
                 + h @ params["w_hh"].T + params["b_hh"])
        i = jax.nn.sigmoid(gates[:, 0 * H:1 * H])
        f = jax.nn.sigmoid(gates[:, 1 * H:2 * H])
        g = jnp.tanh(gates[:, 2 * H:3 * H])
        o = jax.nn.sigmoid(gates[:, 3 * H:4 * H])
        c_new = f * c + i * g
        h_new = o * jnp.tanh(c_new)
        return (h_new, c_new), None

    h0 = jnp.zeros((B, H), jnp.float32)
    c0 = jnp.zeros((B, H), jnp.float32)
    (h_final, _), _ = lax.scan(step, (h0, c0), jnp.transpose(emb, (1, 0, 2)))
    return h_final @ params["w_fc"].T + params["b_fc"]


def init_params(key, vocab_size, embedding_dim, hidden_dim, output_dim):
    ks = jax.random.split(key, 7)
    scale = 1.0 / np.sqrt(hidden_dim)
    return {
        "embedding": jax.random.normal(ks[0], (vocab_size, embedding_dim),
                                       jnp.float32),
        "w_ih": jax.random.uniform(ks[1], (4 * hidden_dim, embedding_dim),
                                   jnp.float32, -scale, scale),
        "w_hh": jax.random.uniform(ks[2], (4 * hidden_dim, hidden_dim),
                                   jnp.float32, -scale, scale),
        "b_ih": jax.random.uniform(ks[3], (4 * hidden_dim,),
                                   jnp.float32, -scale, scale),
        "b_hh": jax.random.uniform(ks[4], (4 * hidden_dim,),
                                   jnp.float32, -scale, scale),
        "w_fc": jax.random.uniform(ks[5], (output_dim, hidden_dim),
                                   jnp.float32, -scale, scale),
        "b_fc": jax.random.uniform(ks[6], (output_dim,),
                                   jnp.float32, -scale, scale),
    }


if __name__ == "__main__":
    VOCAB = 50
    B, S = 4, 8
    E, H, O = 64, 128, 1   # module defaults: embedding_dim=64, hidden_dim=128

    key = jax.random.PRNGKey(0)
    k_param, k_ids = jax.random.split(key)
    params = init_params(k_param, VOCAB, E, H, O)
    input_ids = jax.random.randint(k_ids, (B, S), 0, VOCAB, dtype=jnp.int32)

    out = simple_value_network(input_ids, params)
    out = jax.block_until_ready(out)

    ref = jax.block_until_ready(reference_forward(input_ids, params))
    assert out.shape == (B, O)
    # bf16 MXU operands vs f32 reference: loosened tolerance per perf review.
    np.testing.assert_allclose(np.asarray(out), np.asarray(ref),
                               rtol=3e-2, atol=3e-2)
    print("KERNEL_OK")
</pallas_src>

<mosaic_0001>
module attributes {stable_mosaic.version = 11 : i64} {
  func.func @_lstm_value_kernel(%arg0: i32, %arg1: memref<64x1xi32, #tpu.memory_space<vmem>>, %arg2: memref<128x128xbf16, #tpu.memory_space<vmem>>, %arg3: memref<128x512xbf16, #tpu.memory_space<vmem>>, %arg4: memref<128x512xbf16, #tpu.memory_space<vmem>>, %arg5: memref<1x512xf32, #tpu.memory_space<vmem>>, %arg6: memref<1x128xf32, #tpu.memory_space<vmem>>, %arg7: memref<1x128xf32, #tpu.memory_space<vmem>>, %arg8: memref<8x128xf32, #tpu.memory_space<vmem>>, %arg9: memref<64x512xf32, #tpu.memory_space<vmem>>) attributes {dimension_semantics = [#tpu.dimension_semantics<arbitrary>], iteration_bounds = array<i64: 1>, scalar_prefetch = 0 : i64, scratch_operands = 1 : i64, tpu.core_type = #tpu.core_type<tc>, window_params = [{pipeline_mode = #tpu.pipeline_mode<synchronous>, transform_indices = @transform_0, window_bounds = array<i64: 64, 1>}, {pipeline_mode = #tpu.pipeline_mode<synchronous>, transform_indices = @transform_1, window_bounds = array<i64: 128, 128>}, {pipeline_mode = #tpu.pipeline_mode<synchronous>, transform_indices = @transform_2, window_bounds = array<i64: 128, 512>}, {pipeline_mode = #tpu.pipeline_mode<synchronous>, transform_indices = @transform_3, window_bounds = array<i64: 128, 512>}, {pipeline_mode = #tpu.pipeline_mode<synchronous>, transform_indices = @transform_4, window_bounds = array<i64: 1, 512>}, {pipeline_mode = #tpu.pipeline_mode<synchronous>, transform_indices = @transform_5, window_bounds = array<i64: 1, 128>}, {pipeline_mode = #tpu.pipeline_mode<synchronous>, transform_indices = @transform_6, window_bounds = array<i64: 1, 128>}, {pipeline_mode = #tpu.pipeline_mode<synchronous>, transform_indices = @transform_7, window_bounds = array<i64: 8, 128>}]} {
    %c0 = arith.constant 0 : index
    %c0_0 = arith.constant 0 : index
    %0 = vector.load %arg1[%c0, %c0_0] : memref<64x1xi32, #tpu.memory_space<vmem>>, vector<64x1xi32>
    %1 = tpu.iota {dimensions = array<i32: 1>} : vector<64x128xi32>
    %2 = vector.broadcast %0 : vector<64x1xi32> to vector<64x128xi32>
    %3 = arith.cmpi eq, %2, %1 : vector<64x128xi32>
    %4 = arith.extui %3 : vector<64x128xi1> to vector<64x128xi32>
    %5 = arith.sitofp %4 : vector<64x128xi32> to vector<64x128xf32>
    %6 = arith.truncf %5 : vector<64x128xf32> to vector<64x128xbf16>
    %c0_1 = arith.constant 0 : index
    %c0_2 = arith.constant 0 : index
    %7 = vector.load %arg2[%c0_1, %c0_2] : memref<128x128xbf16, #tpu.memory_space<vmem>>, vector<128x128xbf16>
    %cst = arith.constant dense<0.000000e+00> : vector<64x128xf32>
    %8 = tpu.matmul %6, %7, %cst {dimension_numbers = #tpu.dot_dimension_numbers<[1], [0], [0], [1], [0, 0, 1, 1], [], []>} : vector<64x128xbf16>, vector<128x128xbf16>, vector<64x128xf32> -> vector<64x128xf32>
    %9 = arith.truncf %8 : vector<64x128xf32> to vector<64x128xbf16>
    %c0_3 = arith.constant 0 : index
    %c0_4 = arith.constant 0 : index
    %10 = vector.load %arg3[%c0_3, %c0_4] : memref<128x512xbf16, #tpu.memory_space<vmem>>, vector<128x512xbf16>
    %cst_5 = arith.constant dense<0.000000e+00> : vector<64x512xf32>
    %11 = tpu.matmul %9, %10, %cst_5 {dimension_numbers = #tpu.dot_dimension_numbers<[1], [0], [0], [1], [0, 0, 1, 1], [], []>} : vector<64x128xbf16>, vector<128x512xbf16>, vector<64x512xf32> -> vector<64x512xf32>
    %c0_6 = arith.constant 0 : index
    %c0_7 = arith.constant 0 : index
    %12 = vector.load %arg5[%c0_6, %c0_7] : memref<1x512xf32, #tpu.memory_space<vmem>>, vector<1x512xf32>
    %13 = vector.broadcast %12 : vector<1x512xf32> to vector<64x512xf32>
    %14 = arith.addf %11, %13 : vector<64x512xf32>
    %c0_8 = arith.constant 0 : index
    %c0_9 = arith.constant 0 : index
    %15 = vector.load %arg9[%c0_8, %c0_9] : memref<64x512xf32, #tpu.memory_space<vmem>>, vector<64x512xf32>
    tpu.vector_store %arg9[%c0_8, %c0_9], %14 {strides = array<i32>} : memref<64x512xf32, #tpu.memory_space<vmem>>, vector<64x512xf32>,
    %cst_10 = arith.constant 0.000000e+00 : f32
    %16 = vector.broadcast %cst_10 : f32 to vector<8x128xf32>
    %cst_11 = arith.constant 0.000000e+00 : f32
    %17 = vector.broadcast %cst_11 : f32 to vector<8x128xf32>
    %c0_i32 = arith.constant 0 : i32
    %c8_i32 = arith.constant 8 : i32
    %18 = arith.muli %c0_i32, %c8_i32 : i32
    %19 = tpu.assume_multiple %18, 8 : i32
    %20 = arith.index_cast %19 : i32 to index
    %c0_12 = arith.constant 0 : index
    %21 = vector.load %arg9[%20, %c0_12] : memref<64x512xf32, #tpu.memory_space<vmem>>, vector<8x512xf32>
    %22 = arith.truncf %16 : vector<8x128xf32> to vector<8x128xbf16>
    %c0_13 = arith.constant 0 : index
    %c0_14 = arith.constant 0 : index
    %23 = vector.load %arg4[%c0_13, %c0_14] : memref<128x512xbf16, #tpu.memory_space<vmem>>, vector<128x512xbf16>
    %cst_15 = arith.constant dense<0.000000e+00> : vector<8x512xf32>
    %24 = tpu.matmul %22, %23, %cst_15 {dimension_numbers = #tpu.dot_dimension_numbers<[1], [0], [0], [1], [0, 0, 1, 1], [], []>} : vector<8x128xbf16>, vector<128x512xbf16>, vector<8x512xf32> -> vector<8x512xf32>
    %25 = arith.addf %21, %24 : vector<8x512xf32>
    %26 = vector.extract_strided_slice %25 {offsets = [0, 0], sizes = [8, 128], strides = [1, 1]} : vector<8x512xf32> to vector<8x128xf32>
    %27 = arith.negf %26 : vector<8x128xf32>
    %28 = math.exp %27 : vector<8x128xf32>
    %cst_16 = arith.constant 1.000000e+00 : f32
    %29 = vector.broadcast %cst_16 : f32 to vector<8x128xf32>
    %30 = arith.addf %29, %28 : vector<8x128xf32>
    %31 = arith.divf %29, %30 : vector<8x128xf32>
    %32 = vector.extract_strided_slice %25 {offsets = [0, 128], sizes = [8, 128], strides = [1, 1]} : vector<8x512xf32> to vector<8x128xf32>
    %33 = arith.negf %32 : vector<8x128xf32>
    %34 = math.exp %33 : vector<8x128xf32>
    %cst_17 = arith.constant 1.000000e+00 : f32
    %35 = vector.broadcast %cst_17 : f32 to vector<8x128xf32>
    %36 = arith.addf %35, %34 : vector<8x128xf32>
    %37 = arith.divf %35, %36 : vector<8x128xf32>
    %38 = vector.extract_strided_slice %25 {offsets = [0, 256], sizes = [8, 128], strides = [1, 1]} : vector<8x512xf32> to vector<8x128xf32>
    %39 = math.tanh %38 : vector<8x128xf32>
    %40 = vector.extract_strided_slice %25 {offsets = [0, 384], sizes = [8, 128], strides = [1, 1]} : vector<8x512xf32> to vector<8x128xf32>
    %41 = arith.negf %40 : vector<8x128xf32>
    %42 = math.exp %41 : vector<8x128xf32>
    %cst_18 = arith.constant 1.000000e+00 : f32
    %43 = vector.broadcast %cst_18 : f32 to vector<8x128xf32>
    %44 = arith.addf %43, %42 : vector<8x128xf32>
    %45 = arith.divf %43, %44 : vector<8x128xf32>
    %46 = arith.mulf %37, %17 : vector<8x128xf32>
    %47 = arith.mulf %31, %39 : vector<8x128xf32>
    %48 = arith.addf %46, %47 : vector<8x128xf32>
    %49 = math.tanh %48 : vector<8x128xf32>
    %50 = arith.mulf %45, %49 : vector<8x128xf32>
    %c1_i32 = arith.constant 1 : i32
    %c8_i32_19 = arith.constant 8 : i32
    %51 = arith.muli %c1_i32, %c8_i32_19 : i32
    %52 = tpu.assume_multiple %51, 8 : i32
    %53 = arith.index_cast %52 : i32 to index
    %c0_20 = arith.constant 0 : index
    %54 = vector.load %arg9[%53, %c0_20] : memref<64x512xf32, #tpu.memory_space<vmem>>, vector<8x512xf32>
    %55 = arith.truncf %50 : vector<8x128xf32> to vector<8x128xbf16>
    %c0_21 = arith.constant 0 : index
    %c0_22 = arith.constant 0 : index
    %56 = vector.load %arg4[%c0_21, %c0_22] : memref<128x512xbf16, #tpu.memory_space<vmem>>, vector<128x512xbf16>
    %cst_23 = arith.constant dense<0.000000e+00> : vector<8x512xf32>
    %57 = tpu.matmul %55, %56, %cst_23 {dimension_numbers = #tpu.dot_dimension_numbers<[1], [0], [0], [1], [0, 0, 1, 1], [], []>} : vector<8x128xbf16>, vector<128x512xbf16>, vector<8x512xf32> -> vector<8x512xf32>
    %58 = arith.addf %54, %57 : vector<8x512xf32>
    %59 = vector.extract_strided_slice %58 {offsets = [0, 0], sizes = [8, 128], strides = [1, 1]} : vector<8x512xf32> to vector<8x128xf32>
    %60 = arith.negf %59 : vector<8x128xf32>
    %61 = math.exp %60 : vector<8x128xf32>
    %cst_24 = arith.constant 1.000000e+00 : f32
    %62 = vector.broadcast %cst_24 : f32 to vector<8x128xf32>
    %63 = arith.addf %62, %61 : vector<8x128xf32>
    %64 = arith.divf %62, %63 : vector<8x128xf32>
    %65 = vector.extract_strided_slice %58 {offsets = [0, 128], sizes = [8, 128], strides = [1, 1]} : vector<8x512xf32> to vector<8x128xf32>
    %66 = arith.negf %65 : vector<8x128xf32>
    %67 = math.exp %66 : vector<8x128xf32>
    %cst_25 = arith.constant 1.000000e+00 : f32
    %68 = vector.broadcast %cst_25 : f32 to vector<8x128xf32>
    %69 = arith.addf %68, %67 : vector<8x128xf32>
    %70 = arith.divf %68, %69 : vector<8x128xf32>
    %71 = vector.extract_strided_slice %58 {offsets = [0, 256], sizes = [8, 128], strides = [1, 1]} : vector<8x512xf32> to vector<8x128xf32>
    %72 = math.tanh %71 : vector<8x128xf32>
    %73 = vector.extract_strided_slice %58 {offsets = [0, 384], sizes = [8, 128], strides = [1, 1]} : vector<8x512xf32> to vector<8x128xf32>
    %74 = arith.negf %73 : vector<8x128xf32>
    %75 = math.exp %74 : vector<8x128xf32>
    %cst_26 = arith.constant 1.000000e+00 : f32
    %76 = vector.broadcast %cst_26 : f32 to vector<8x128xf32>
    %77 = arith.addf %76, %75 : vector<8x128xf32>
    %78 = arith.divf %76, %77 : vector<8x128xf32>
    %79 = arith.mulf %70, %48 : vector<8x128xf32>
    %80 = arith.mulf %64, %72 : vector<8x128xf32>
    %81 = arith.addf %79, %80 : vector<8x128xf32>
    %82 = math.tanh %81 : vector<8x128xf32>
    %83 = arith.mulf %78, %82 : vector<8x128xf32>
    %c2_i32 = arith.constant 2 : i32
    %c8_i32_27 = arith.constant 8 : i32
    %84 = arith.muli %c2_i32, %c8_i32_27 : i32
    %85 = tpu.assume_multiple %84, 8 : i32
    %86 = arith.index_cast %85 : i32 to index
    %c0_28 = arith.constant 0 : index
    %87 = vector.load %arg9[%86, %c0_28] : memref<64x512xf32, #tpu.memory_space<vmem>>, vector<8x512xf32>
    %88 = arith.truncf %83 : vector<8x128xf32> to vector<8x128xbf16>
    %c0_29 = arith.constant 0 : index
    %c0_30 = arith.constant 0 : index
    %89 = vector.load %arg4[%c0_29, %c0_30] : memref<128x512xbf16, #tpu.memory_space<vmem>>, vector<128x512xbf16>
    %cst_31 = arith.constant dense<0.000000e+00> : vector<8x512xf32>
    %90 = tpu.matmul %88, %89, %cst_31 {dimension_numbers = #tpu.dot_dimension_numbers<[1], [0], [0], [1], [0, 0, 1, 1], [], []>} : vector<8x128xbf16>, vector<128x512xbf16>, vector<8x512xf32> -> vector<8x512xf32>
    %91 = arith.addf %87, %90 : vector<8x512xf32>
    %92 = vector.extract_strided_slice %91 {offsets = [0, 0], sizes = [8, 128], strides = [1, 1]} : vector<8x512xf32> to vector<8x128xf32>
    %93 = arith.negf %92 : vector<8x128xf32>
    %94 = math.exp %93 : vector<8x128xf32>
    %cst_32 = arith.constant 1.000000e+00 : f32
    %95 = vector.broadcast %cst_32 : f32 to vector<8x128xf32>
    %96 = arith.addf %95, %94 : vector<8x128xf32>
    %97 = arith.divf %95, %96 : vector<8x128xf32>
    %98 = vector.extract_strided_slice %91 {offsets = [0, 128], sizes = [8, 128], strides = [1, 1]} : vector<8x512xf32> to vector<8x128xf32>
    %99 = arith.negf %98 : vector<8x128xf32>
    %100 = math.exp %99 : vector<8x128xf32>
    %cst_33 = arith.constant 1.000000e+00 : f32
    %101 = vector.broadcast %cst_33 : f32 to vector<8x128xf32>
    %102 = arith.addf %101, %100 : vector<8x128xf32>
    %103 = arith.divf %101, %102 : vector<8x128xf32>
    %104 = vector.extract_strided_slice %91 {offsets = [0, 256], sizes = [8, 128], strides = [1, 1]} : vector<8x512xf32> to vector<8x128xf32>
    %105 = math.tanh %104 : vector<8x128xf32>
    %106 = vector.extract_strided_slice %91 {offsets = [0, 384], sizes = [8, 128], strides = [1, 1]} : vector<8x512xf32> to vector<8x128xf32>
    %107 = arith.negf %106 : vector<8x128xf32>
    %108 = math.exp %107 : vector<8x128xf32>
    %cst_34 = arith.constant 1.000000e+00 : f32
    %109 = vector.broadcast %cst_34 : f32 to vector<8x128xf32>
    %110 = arith.addf %109, %108 : vector<8x128xf32>
    %111 = arith.divf %109, %110 : vector<8x128xf32>
    %112 = arith.mulf %103, %81 : vector<8x128xf32>
    %113 = arith.mulf %97, %105 : vector<8x128xf32>
    %114 = arith.addf %112, %113 : vector<8x128xf32>
    %115 = math.tanh %114 : vector<8x128xf32>
    %116 = arith.mulf %111, %115 : vector<8x128xf32>
    %c3_i32 = arith.constant 3 : i32
    %c8_i32_35 = arith.constant 8 : i32
    %117 = arith.muli %c3_i32, %c8_i32_35 : i32
    %118 = tpu.assume_multiple %117, 8 : i32
    %119 = arith.index_cast %118 : i32 to index
    %c0_36 = arith.constant 0 : index
    %120 = vector.load %arg9[%119, %c0_36] : memref<64x512xf32, #tpu.memory_space<vmem>>, vector<8x512xf32>
    %121 = arith.truncf %116 : vector<8x128xf32> to vector<8x128xbf16>
    %c0_37 = arith.constant 0 : index
    %c0_38 = arith.constant 0 : index
    %122 = vector.load %arg4[%c0_37, %c0_38] : memref<128x512xbf16, #tpu.memory_space<vmem>>, vector<128x512xbf16>
    %cst_39 = arith.constant dense<0.000000e+00> : vector<8x512xf32>
    %123 = tpu.matmul %121, %122, %cst_39 {dimension_numbers = #tpu.dot_dimension_numbers<[1], [0], [0], [1], [0, 0, 1, 1], [], []>} : vector<8x128xbf16>, vector<128x512xbf16>, vector<8x512xf32> -> vector<8x512xf32>
    %124 = arith.addf %120, %123 : vector<8x512xf32>
    %125 = vector.extract_strided_slice %124 {offsets = [0, 0], sizes = [8, 128], strides = [1, 1]} : vector<8x512xf32> to vector<8x128xf32>
    %126 = arith.negf %125 : vector<8x128xf32>
    %127 = math.exp %126 : vector<8x128xf32>
    %cst_40 = arith.constant 1.000000e+00 : f32
    %128 = vector.broadcast %cst_40 : f32 to vector<8x128xf32>
    %129 = arith.addf %128, %127 : vector<8x128xf32>
    %130 = arith.divf %128, %129 : vector<8x128xf32>
    %131 = vector.extract_strided_slice %124 {offsets = [0, 128], sizes = [8, 128], strides = [1, 1]} : vector<8x512xf32> to vector<8x128xf32>
    %132 = arith.negf %131 : vector<8x128xf32>
    %133 = math.exp %132 : vector<8x128xf32>
    %cst_41 = arith.constant 1.000000e+00 : f32
    %134 = vector.broadcast %cst_41 : f32 to vector<8x128xf32>
    %135 = arith.addf %134, %133 : vector<8x128xf32>
    %136 = arith.divf %134, %135 : vector<8x128xf32>
    %137 = vector.extract_strided_slice %124 {offsets = [0, 256], sizes = [8, 128], strides = [1, 1]} : vector<8x512xf32> to vector<8x128xf32>
    %138 = math.tanh %137 : vector<8x128xf32>
    %139 = vector.extract_strided_slice %124 {offsets = [0, 384], sizes = [8, 128], strides = [1, 1]} : vector<8x512xf32> to vector<8x128xf32>
    %140 = arith.negf %139 : vector<8x128xf32>
    %141 = math.exp %140 : vector<8x128xf32>
    %cst_42 = arith.constant 1.000000e+00 : f32
    %142 = vector.broadcast %cst_42 : f32 to vector<8x128xf32>
    %143 = arith.addf %142, %141 : vector<8x128xf32>
    %144 = arith.divf %142, %143 : vector<8x128xf32>
    %145 = arith.mulf %136, %114 : vector<8x128xf32>
    %146 = arith.mulf %130, %138 : vector<8x128xf32>
    %147 = arith.addf %145, %146 : vector<8x128xf32>
    %148 = math.tanh %147 : vector<8x128xf32>
    %149 = arith.mulf %144, %148 : vector<8x128xf32>
    %c4_i32 = arith.constant 4 : i32
    %c8_i32_43 = arith.constant 8 : i32
    %150 = arith.muli %c4_i32, %c8_i32_43 : i32
    %151 = tpu.assume_multiple %150, 8 : i32
    %152 = arith.index_cast %151 : i32 to index
    %c0_44 = arith.constant 0 : index
    %153 = vector.load %arg9[%152, %c0_44] : memref<64x512xf32, #tpu.memory_space<vmem>>, vector<8x512xf32>
    %154 = arith.truncf %149 : vector<8x128xf32> to vector<8x128xbf16>
    %c0_45 = arith.constant 0 : index
    %c0_46 = arith.constant 0 : index
    %155 = vector.load %arg4[%c0_45, %c0_46] : memref<128x512xbf16, #tpu.memory_space<vmem>>, vector<128x512xbf16>
    %cst_47 = arith.constant dense<0.000000e+00> : vector<8x512xf32>
    %156 = tpu.matmul %154, %155, %cst_47 {dimension_numbers = #tpu.dot_dimension_numbers<[1], [0], [0], [1], [0, 0, 1, 1], [], []>} : vector<8x128xbf16>, vector<128x512xbf16>, vector<8x512xf32> -> vector<8x512xf32>
    %157 = arith.addf %153, %156 : vector<8x512xf32>
    %158 = vector.extract_strided_slice %157 {offsets = [0, 0], sizes = [8, 128], strides = [1, 1]} : vector<8x512xf32> to vector<8x128xf32>
    %159 = arith.negf %158 : vector<8x128xf32>
    %160 = math.exp %159 : vector<8x128xf32>
    %cst_48 = arith.constant 1.000000e+00 : f32
    %161 = vector.broadcast %cst_48 : f32 to vector<8x128xf32>
    %162 = arith.addf %161, %160 : vector<8x128xf32>
    %163 = arith.divf %161, %162 : vector<8x128xf32>
    %164 = vector.extract_strided_slice %157 {offsets = [0, 128], sizes = [8, 128], strides = [1, 1]} : vector<8x512xf32> to vector<8x128xf32>
    %165 = arith.negf %164 : vector<8x128xf32>
    %166 = math.exp %165 : vector<8x128xf32>
    %cst_49 = arith.constant 1.000000e+00 : f32
    %167 = vector.broadcast %cst_49 : f32 to vector<8x128xf32>
    %168 = arith.addf %167, %166 : vector<8x128xf32>
    %169 = arith.divf %167, %168 : vector<8x128xf32>
    %170 = vector.extract_strided_slice %157 {offsets = [0, 256], sizes = [8, 128], strides = [1, 1]} : vector<8x512xf32> to vector<8x128xf32>
    %171 = math.tanh %170 : vector<8x128xf32>
    %172 = vector.extract_strided_slice %157 {offsets = [0, 384], sizes = [8, 128], strides = [1, 1]} : vector<8x512xf32> to vector<8x128xf32>
    %173 = arith.negf %172 : vector<8x128xf32>
    %174 = math.exp %173 : vector<8x128xf32>
    %cst_50 = arith.constant 1.000000e+00 : f32
    %175 = vector.broadcast %cst_50 : f32 to vector<8x128xf32>
    %176 = arith.addf %175, %174 : vector<8x128xf32>
    %177 = arith.divf %175, %176 : vector<8x128xf32>
    %178 = arith.mulf %169, %147 : vector<8x128xf32>
    %179 = arith.mulf %163, %171 : vector<8x128xf32>
    %180 = arith.addf %178, %179 : vector<8x128xf32>
    %181 = math.tanh %180 : vector<8x128xf32>
    %182 = arith.mulf %177, %181 : vector<8x128xf32>
    %c5_i32 = arith.constant 5 : i32
    %c8_i32_51 = arith.constant 8 : i32
    %183 = arith.muli %c5_i32, %c8_i32_51 : i32
    %184 = tpu.assume_multiple %183, 8 : i32
    %185 = arith.index_cast %184 : i32 to index
    %c0_52 = arith.constant 0 : index
    %186 = vector.load %arg9[%185, %c0_52] : memref<64x512xf32, #tpu.memory_space<vmem>>, vector<8x512xf32>
    %187 = arith.truncf %182 : vector<8x128xf32> to vector<8x128xbf16>
    %c0_53 = arith.constant 0 : index
    %c0_54 = arith.constant 0 : index
    %188 = vector.load %arg4[%c0_53, %c0_54] : memref<128x512xbf16, #tpu.memory_space<vmem>>, vector<128x512xbf16>
    %cst_55 = arith.constant dense<0.000000e+00> : vector<8x512xf32>
    %189 = tpu.matmul %187, %188, %cst_55 {dimension_numbers = #tpu.dot_dimension_numbers<[1], [0], [0], [1], [0, 0, 1, 1], [], []>} : vector<8x128xbf16>, vector<128x512xbf16>, vector<8x512xf32> -> vector<8x512xf32>
    %190 = arith.addf %186, %189 : vector<8x512xf32>
    %191 = vector.extract_strided_slice %190 {offsets = [0, 0], sizes = [8, 128], strides = [1, 1]} : vector<8x512xf32> to vector<8x128xf32>
    %192 = arith.negf %191 : vector<8x128xf32>
    %193 = math.exp %192 : vector<8x128xf32>
    %cst_56 = arith.constant 1.000000e+00 : f32
    %194 = vector.broadcast %cst_56 : f32 to vector<8x128xf32>
    %195 = arith.addf %194, %193 : vector<8x128xf32>
    %196 = arith.divf %194, %195 : vector<8x128xf32>
    %197 = vector.extract_strided_slice %190 {offsets = [0, 128], sizes = [8, 128], strides = [1, 1]} : vector<8x512xf32> to vector<8x128xf32>
    %198 = arith.negf %197 : vector<8x128xf32>
    %199 = math.exp %198 : vector<8x128xf32>
    %cst_57 = arith.constant 1.000000e+00 : f32
    %200 = vector.broadcast %cst_57 : f32 to vector<8x128xf32>
    %201 = arith.addf %200, %199 : vector<8x128xf32>
    %202 = arith.divf %200, %201 : vector<8x128xf32>
    %203 = vector.extract_strided_slice %190 {offsets = [0, 256], sizes = [8, 128], strides = [1, 1]} : vector<8x512xf32> to vector<8x128xf32>
    %204 = math.tanh %203 : vector<8x128xf32>
    %205 = vector.extract_strided_slice %190 {offsets = [0, 384], sizes = [8, 128], strides = [1, 1]} : vector<8x512xf32> to vector<8x128xf32>
    %206 = arith.negf %205 : vector<8x128xf32>
    %207 = math.exp %206 : vector<8x128xf32>
    %cst_58 = arith.constant 1.000000e+00 : f32
    %208 = vector.broadcast %cst_58 : f32 to vector<8x128xf32>
    %209 = arith.addf %208, %207 : vector<8x128xf32>
    %210 = arith.divf %208, %209 : vector<8x128xf32>
    %211 = arith.mulf %202, %180 : vector<8x128xf32>
    %212 = arith.mulf %196, %204 : vector<8x128xf32>
    %213 = arith.addf %211, %212 : vector<8x128xf32>
    %214 = math.tanh %213 : vector<8x128xf32>
    %215 = arith.mulf %210, %214 : vector<8x128xf32>
    %c6_i32 = arith.constant 6 : i32
    %c8_i32_59 = arith.constant 8 : i32
    %216 = arith.muli %c6_i32, %c8_i32_59 : i32
    %217 = tpu.assume_multiple %216, 8 : i32
    %218 = arith.index_cast %217 : i32 to index
    %c0_60 = arith.constant 0 : index
    %219 = vector.load %arg9[%218, %c0_60] : memref<64x512xf32, #tpu.memory_space<vmem>>, vector<8x512xf32>
    %220 = arith.truncf %215 : vector<8x128xf32> to vector<8x128xbf16>
    %c0_61 = arith.constant 0 : index
    %c0_62 = arith.constant 0 : index
    %221 = vector.load %arg4[%c0_61, %c0_62] : memref<128x512xbf16, #tpu.memory_space<vmem>>, vector<128x512xbf16>
    %cst_63 = arith.constant dense<0.000000e+00> : vector<8x512xf32>
    %222 = tpu.matmul %220, %221, %cst_63 {dimension_numbers = #tpu.dot_dimension_numbers<[1], [0], [0], [1], [0, 0, 1, 1], [], []>} : vector<8x128xbf16>, vector<128x512xbf16>, vector<8x512xf32> -> vector<8x512xf32>
    %223 = arith.addf %219, %222 : vector<8x512xf32>
    %224 = vector.extract_strided_slice %223 {offsets = [0, 0], sizes = [8, 128], strides = [1, 1]} : vector<8x512xf32> to vector<8x128xf32>
    %225 = arith.negf %224 : vector<8x128xf32>
    %226 = math.exp %225 : vector<8x128xf32>
    %cst_64 = arith.constant 1.000000e+00 : f32
    %227 = vector.broadcast %cst_64 : f32 to vector<8x128xf32>
    %228 = arith.addf %227, %226 : vector<8x128xf32>
    %229 = arith.divf %227, %228 : vector<8x128xf32>
    %230 = vector.extract_strided_slice %223 {offsets = [0, 128], sizes = [8, 128], strides = [1, 1]} : vector<8x512xf32> to vector<8x128xf32>
    %231 = arith.negf %230 : vector<8x128xf32>
    %232 = math.exp %231 : vector<8x128xf32>
    %cst_65 = arith.constant 1.000000e+00 : f32
    %233 = vector.broadcast %cst_65 : f32 to vector<8x128xf32>
    %234 = arith.addf %233, %232 : vector<8x128xf32>
    %235 = arith.divf %233, %234 : vector<8x128xf32>
    %236 = vector.extract_strided_slice %223 {offsets = [0, 256], sizes = [8, 128], strides = [1, 1]} : vector<8x512xf32> to vector<8x128xf32>
    %237 = math.tanh %236 : vector<8x128xf32>
    %238 = vector.extract_strided_slice %223 {offsets = [0, 384], sizes = [8, 128], strides = [1, 1]} : vector<8x512xf32> to vector<8x128xf32>
    %239 = arith.negf %238 : vector<8x128xf32>
    %240 = math.exp %239 : vector<8x128xf32>
    %cst_66 = arith.constant 1.000000e+00 : f32
    %241 = vector.broadcast %cst_66 : f32 to vector<8x128xf32>
    %242 = arith.addf %241, %240 : vector<8x128xf32>
    %243 = arith.divf %241, %242 : vector<8x128xf32>
    %244 = arith.mulf %235, %213 : vector<8x128xf32>
    %245 = arith.mulf %229, %237 : vector<8x128xf32>
    %246 = arith.addf %244, %245 : vector<8x128xf32>
    %247 = math.tanh %246 : vector<8x128xf32>
    %248 = arith.mulf %243, %247 : vector<8x128xf32>
    %c7_i32 = arith.constant 7 : i32
    %c8_i32_67 = arith.constant 8 : i32
    %249 = arith.muli %c7_i32, %c8_i32_67 : i32
    %250 = tpu.assume_multiple %249, 8 : i32
    %251 = arith.index_cast %250 : i32 to index
    %c0_68 = arith.constant 0 : index
    %252 = vector.load %arg9[%251, %c0_68] : memref<64x512xf32, #tpu.memory_space<vmem>>, vector<8x512xf32>
    %253 = arith.truncf %248 : vector<8x128xf32> to vector<8x128xbf16>
    %c0_69 = arith.constant 0 : index
    %c0_70 = arith.constant 0 : index
    %254 = vector.load %arg4[%c0_69, %c0_70] : memref<128x512xbf16, #tpu.memory_space<vmem>>, vector<128x512xbf16>
    %cst_71 = arith.constant dense<0.000000e+00> : vector<8x512xf32>
    %255 = tpu.matmul %253, %254, %cst_71 {dimension_numbers = #tpu.dot_dimension_numbers<[1], [0], [0], [1], [0, 0, 1, 1], [], []>} : vector<8x128xbf16>, vector<128x512xbf16>, vector<8x512xf32> -> vector<8x512xf32>
    %256 = arith.addf %252, %255 : vector<8x512xf32>
    %257 = vector.extract_strided_slice %256 {offsets = [0, 0], sizes = [8, 128], strides = [1, 1]} : vector<8x512xf32> to vector<8x128xf32>
    %258 = arith.negf %257 : vector<8x128xf32>
    %259 = math.exp %258 : vector<8x128xf32>
    %cst_72 = arith.constant 1.000000e+00 : f32
    %260 = vector.broadcast %cst_72 : f32 to vector<8x128xf32>
    %261 = arith.addf %260, %259 : vector<8x128xf32>
    %262 = arith.divf %260, %261 : vector<8x128xf32>
    %263 = vector.extract_strided_slice %256 {offsets = [0, 128], sizes = [8, 128], strides = [1, 1]} : vector<8x512xf32> to vector<8x128xf32>
    %264 = arith.negf %263 : vector<8x128xf32>
    %265 = math.exp %264 : vector<8x128xf32>
    %cst_73 = arith.constant 1.000000e+00 : f32
    %266 = vector.broadcast %cst_73 : f32 to vector<8x128xf32>
    %267 = arith.addf %266, %265 : vector<8x128xf32>
    %268 = arith.divf %266, %267 : vector<8x128xf32>
    %269 = vector.extract_strided_slice %256 {offsets = [0, 256], sizes = [8, 128], strides = [1, 1]} : vector<8x512xf32> to vector<8x128xf32>
    %270 = math.tanh %269 : vector<8x128xf32>
    %271 = vector.extract_strided_slice %256 {offsets = [0, 384], sizes = [8, 128], strides = [1, 1]} : vector<8x512xf32> to vector<8x128xf32>
    %272 = arith.negf %271 : vector<8x128xf32>
    %273 = math.exp %272 : vector<8x128xf32>
    %cst_74 = arith.constant 1.000000e+00 : f32
    %274 = vector.broadcast %cst_74 : f32 to vector<8x128xf32>
    %275 = arith.addf %274, %273 : vector<8x128xf32>
    %276 = arith.divf %274, %275 : vector<8x128xf32>
    %277 = arith.mulf %268, %246 : vector<8x128xf32>
    %278 = arith.mulf %262, %270 : vector<8x128xf32>
    %279 = arith.addf %277, %278 : vector<8x128xf32>
    %280 = math.tanh %279 : vector<8x128xf32>
    %281 = arith.mulf %276, %280 : vector<8x128xf32>
    %c8_i32_75 = arith.constant 8 : i32
    %c0_76 = arith.constant 0 : index
    %c0_77 = arith.constant 0 : index
    %282 = vector.load %arg6[%c0_76, %c0_77] : memref<1x128xf32, #tpu.memory_space<vmem>>, vector<1x128xf32>
    %283 = vector.broadcast %282 : vector<1x128xf32> to vector<8x128xf32>
    %284 = arith.mulf %281, %283 : vector<8x128xf32>
    %cst_78 = arith.constant dense<0.000000e+00> : vector<8xf32>
    %285 = vector.multi_reduction <add>, %284, %cst_78 [1] : vector<8x128xf32> to vector<8xf32>
    %286 = vector.shape_cast %285 : vector<8xf32> to vector<8x1xf32>
    %287 = vector.shape_cast %286 : vector<8x1xf32> to vector<8x1xf32>
    %288 = vector.broadcast %287 : vector<8x1xf32> to vector<8x128xf32>
    %c0_79 = arith.constant 0 : index
    %c0_80 = arith.constant 0 : index
    %289 = vector.load %arg7[%c0_79, %c0_80] : memref<1x128xf32, #tpu.memory_space<vmem>>, vector<1x128xf32>
    %290 = vector.broadcast %289 : vector<1x128xf32> to vector<8x128xf32>
    %291 = arith.addf %288, %290 : vector<8x128xf32>
    %c0_81 = arith.constant 0 : index
    %c0_82 = arith.constant 0 : index
    %292 = vector.load %arg8[%c0_81, %c0_82] : memref<8x128xf32, #tpu.memory_space<vmem>>, vector<8x128xf32>
    tpu.vector_store %arg8[%c0_81, %c0_82], %291 {strides = array<i32>} : memref<8x128xf32, #tpu.memory_space<vmem>>, vector<8x128xf32>,
    return
  }
  func.func @transform_0(%arg0: i32) -> (i32, i32) {
    %c0_i32 = arith.constant 0 : i32
    %c0_i32_0 = arith.constant 0 : i32
    %c0_i32_1 = arith.constant 0 : i32
    return %c0_i32, %c0_i32_0 : i32, i32
  }
  func.func @transform_1(%arg0: i32) -> (i32, i32) {
    %c0_i32 = arith.constant 0 : i32
    %c0_i32_0 = arith.constant 0 : i32
    %c0_i32_1 = arith.constant 0 : i32
    return %c0_i32, %c0_i32_0 : i32, i32
  }
  func.func @transform_2(%arg0: i32) -> (i32, i32) {
    %c0_i32 = arith.constant 0 : i32
    %c0_i32_0 = arith.constant 0 : i32
    %c0_i32_1 = arith.constant 0 : i32
    return %c0_i32, %c0_i32_0 : i32, i32
  }
  func.func @transform_3(%arg0: i32) -> (i32, i32) {
    %c0_i32 = arith.constant 0 : i32
    %c0_i32_0 = arith.constant 0 : i32
    %c0_i32_1 = arith.constant 0 : i32
    return %c0_i32, %c0_i32_0 : i32, i32
  }
  func.func @transform_4(%arg0: i32) -> (i32, i32) {
    %c0_i32 = arith.constant 0 : i32
    %c0_i32_0 = arith.constant 0 : i32
    %c0_i32_1 = arith.constant 0 : i32
    return %c0_i32, %c0_i32_0 : i32, i32
  }
  func.func @transform_5(%arg0: i32) -> (i32, i32) {
    %c0_i32 = arith.constant 0 : i32
    %c0_i32_0 = arith.constant 0 : i32
    %c0_i32_1 = arith.constant 0 : i32
    return %c0_i32, %c0_i32_0 : i32, i32
  }
  func.func @transform_6(%arg0: i32) -> (i32, i32) {
    %c0_i32 = arith.constant 0 : i32
    %c0_i32_0 = arith.constant 0 : i32
    %c0_i32_1 = arith.constant 0 : i32
    return %c0_i32, %c0_i32_0 : i32, i32
  }
  func.func @transform_7(%arg0: i32) -> (i32, i32) {
    %c0_i32 = arith.constant 0 : i32
    %c0_i32_0 = arith.constant 0 : i32
    %c0_i32_1 = arith.constant 0 : i32
    return %c0_i32, %c0_i32_0 : i32, i32
  }
}

</mosaic_0001>

<llo_original>
// kernel: simple_value_network.1
$region0: #{simple_value_network.1}
  #allocation0 [shape = 'u32[]', space=smem, size = 0x4, offset = 0x4, fixed_abs, tag = 'smem constant byte address 0x4 - core index']
  #allocation1 [shape = 'u32[144,128]{1,0:T(1,128)}', space=vmem, size = 0x12000, scoped, tag = 'internal scratch']
  #allocation2 [shape = 'f32[64,512]{1,0:T(8,128)}', space=vmem, size = 0x20000, scoped, tag = 'scratch operand']
  %s0 = inlined_call_operand.vmem [shape: s32[64,1], index: 0, kind: input, shape index: {}]
  %s1 = inlined_call_operand.vmem [shape: bf16[128,128], index: 1, kind: input, shape index: {}]
  %s2 = inlined_call_operand.vmem [shape: bf16[128,512], index: 2, kind: input, shape index: {}]
  %s3 = inlined_call_operand.vmem [shape: bf16[128,512], index: 3, kind: input, shape index: {}]
  %s4 = inlined_call_operand.vmem [shape: f32[1,512], index: 4, kind: input, shape index: {}]
  %s5 = inlined_call_operand.vmem [shape: f32[1,128], index: 5, kind: input, shape index: {}]
  %s6 = inlined_call_operand.vmem [shape: f32[1,128], index: 6, kind: input, shape index: {}]
  %s7 = inlined_call_operand.vmem [shape: f32[8,128], index: 7, kind: output, shape index: {}]
  %s8 = sld [smem:[#allocation0]]
  $region38: #{simple_value_network.1} parent=0
    _
  %s10 = ssub.s32 1, %s8
  %s11 = scalar_select 0, %s10, %s8
  // Predicated region
  $region2: #{simple_value_network.1} parent=0 // pred_check
    _
  $region3: #{simple_value_network.1} parent=0 // pred_check_branch
    %13 = sbr.rel (0) target = $region5
  $region4: #{simple_value_network.1} parent=0 // pred_region
    _
  $region5: #{simple_value_network.1} parent=0 // pred_fallthru
    _
  // Predicated region
  $region6: #{simple_value_network.1} parent=0 // pred_check
    _
  $region7: #{simple_value_network.1} parent=0 // pred_check_branch
    %15 = sbr.rel (0) target = $region9
  $region8: #{simple_value_network.1} parent=0 // pred_region
    _
  $region9: #{simple_value_network.1} parent=0 // pred_fallthru
    _
  // Predicated region
  $region10: #{simple_value_network.1} parent=0 // pred_check
    _
  $region11: #{simple_value_network.1} parent=0 // pred_check_branch
    %17 = sbr.rel (0) target = $region13
  $region12: #{simple_value_network.1} parent=0 // pred_region
    _
  $region13: #{simple_value_network.1} parent=0 // pred_fallthru
    _
  // Predicated region
  $region14: #{simple_value_network.1} parent=0 // pred_check
    _
  $region15: #{simple_value_network.1} parent=0 // pred_check_branch
    %19 = sbr.rel (0) target = $region17
  $region16: #{simple_value_network.1} parent=0 // pred_region
    _
  $region17: #{simple_value_network.1} parent=0 // pred_fallthru
    _
  // Predicated region
  $region18: #{simple_value_network.1} parent=0 // pred_check
    _
  $region19: #{simple_value_network.1} parent=0 // pred_check_branch
    %21 = sbr.rel (0) target = $region21
  $region20: #{simple_value_network.1} parent=0 // pred_region
    _
  $region21: #{simple_value_network.1} parent=0 // pred_fallthru
    _
  // Predicated region
  $region22: #{simple_value_network.1} parent=0 // pred_check
    _
  $region23: #{simple_value_network.1} parent=0 // pred_check_branch
    %23 = sbr.rel (0) target = $region25
  $region24: #{simple_value_network.1} parent=0 // pred_region
    _
  $region25: #{simple_value_network.1} parent=0 // pred_fallthru
    _
  // Predicated region
  $region26: #{simple_value_network.1} parent=0 // pred_check
    _
  $region27: #{simple_value_network.1} parent=0 // pred_check_branch
    %25 = sbr.rel (0) target = $region29
  $region28: #{simple_value_network.1} parent=0 // pred_region
    _
  $region29: #{simple_value_network.1} parent=0 // pred_fallthru
    _
  %v27 = vld [vmem:[%s0] sm:$0xff]
  %v28 = vld [vmem:[%s0 + $0x8] sm:$0xff]
  %v29 = vld [vmem:[%s0 + $0x10] sm:$0xff]
  %v30 = vld [vmem:[%s0 + $0x18] sm:$0xff]
  %v31 = vld [vmem:[%s0 + $0x20] sm:$0xff]
  %v32 = vld [vmem:[%s0 + $0x28] sm:$0xff]
  %v33 = vld [vmem:[%s0 + $0x30] sm:$0xff]
  %v34 = vld [vmem:[%s0 + $0x38] sm:$0xff]
  %v35 = vlaneseq
  %v36 = vand.u32 %v35, 127
  %37 = vset.pattern.permute.xlu0 0
  %38 = vperm.xlu0 %37, %v27
  %v39 = vpop.permute.xlu0 %38
  %40 = vset.pattern.permute.xlu0 0
  %41 = vperm.xlu0 %40, %v28
  %v42 = vpop.permute.xlu0 %41
  %43 = vset.pattern.permute.xlu0 0
  %44 = vperm.xlu0 %43, %v29
  %v45 = vpop.permute.xlu0 %44
  %46 = vset.pattern.permute.xlu0 0
  %47 = vperm.xlu0 %46, %v30
  %v48 = vpop.permute.xlu0 %47
  %49 = vset.pattern.permute.xlu0 0
  %50 = vperm.xlu0 %49, %v31
  %v51 = vpop.permute.xlu0 %50
  %52 = vset.pattern.permute.xlu0 0
  %53 = vperm.xlu0 %52, %v32
  %v54 = vpop.permute.xlu0 %53
  %55 = vset.pattern.permute.xlu0 0
  %56 = vperm.xlu0 %55, %v33
  %v57 = vpop.permute.xlu0 %56
  %58 = vset.pattern.permute.xlu0 0
  %59 = vperm.xlu0 %58, %v34
  %v60 = vpop.permute.xlu0 %59
  %vm61 = vcmp.eq.s32.totalorder %v39, %v36
  %vm62 = vcmp.eq.s32.totalorder %v42, %v36
  %vm63 = vcmp.eq.s32.totalorder %v45, %v36
  %vm64 = vcmp.eq.s32.totalorder %v48, %v36
  %vm65 = vcmp.eq.s32.totalorder %v51, %v36
  %vm66 = vcmp.eq.s32.totalorder %v54, %v36
  %vm67 = vcmp.eq.s32.totalorder %v57, %v36
  %vm68 = vcmp.eq.s32.totalorder %v60, %v36
  %v69 = vsel %vm61, 1, 0
  %v70 = vsel %vm62, 1, 0
  %v71 = vsel %vm63, 1, 0
  %v72 = vsel %vm64, 1, 0
  %v73 = vsel %vm65, 1, 0
  %v74 = vsel %vm66, 1, 0
  %v75 = vsel %vm67, 1, 0
  %v76 = vsel %vm68, 1, 0
  %v77 = vcvt.s32.f32 %v69
  %v78 = vcvt.s32.f32 %v70
  %v79 = vcvt.s32.f32 %v71
  %v80 = vcvt.s32.f32 %v72
  %v81 = vcvt.s32.f32 %v73
  %v82 = vcvt.s32.f32 %v74
  %v83 = vcvt.s32.f32 %v75
  %v84 = vcvt.s32.f32 %v76
  %v85 = vpack.c.bf16 %v78, %v77
  %v86 = vpack.c.bf16 %v80, %v79
  %v87 = vpack.c.bf16 %v82, %v81
  %v88 = vpack.c.bf16 %v84, %v83
  %v89 = vld [vmem:[%s1] sm:$0xf]
  %v90 = vld [vmem:[%s1 + $0x4] sm:$0xf]
  %v91 = vld [vmem:[%s1 + $0x8] sm:$0xf]
  %v92 = vld [vmem:[%s1 + $0xc] sm:$0xf]
  %v93 = vld [vmem:[%s1 + $0x10] sm:$0xf]
  %v94 = vld [vmem:[%s1 + $0x14] sm:$0xf]
  %v95 = vld [vmem:[%s1 + $0x18] sm:$0xf]
  %v96 = vld [vmem:[%s1 + $0x1c] sm:$0xf]
  %v97 = vld [vmem:[%s1 + $0x20] sm:$0xf]
  %v98 = vld [vmem:[%s1 + $0x24] sm:$0xf]
  %v99 = vld [vmem:[%s1 + $0x28] sm:$0xf]
  %v100 = vld [vmem:[%s1 + $0x2c] sm:$0xf]
  %v101 = vld [vmem:[%s1 + $0x30] sm:$0xf]
  %v102 = vld [vmem:[%s1 + $0x34] sm:$0xf]
  %v103 = vld [vmem:[%s1 + $0x38] sm:$0xf]
  %v104 = vld [vmem:[%s1 + $0x3c] sm:$0xf]
  %v121 = vunpack.c.l.b16 %v89
  %v122 = vunpack.c.l.b16 %v90
  %v123 = vunpack.c.l.b16 %v91
  %v124 = vunpack.c.l.b16 %v92
  %v125 = vunpack.c.l.b16 %v93
  %v126 = vunpack.c.l.b16 %v94
  %v127 = vunpack.c.l.b16 %v95
  %v128 = vunpack.c.l.b16 %v96
  %v129 = vunpack.c.l.b16 %v97
  %v130 = vunpack.c.l.b16 %v98
  %v131 = vunpack.c.l.b16 %v99
  %v132 = vunpack.c.l.b16 %v100
  %v133 = vunpack.c.l.b16 %v101
  %v134 = vunpack.c.l.b16 %v102
  %v135 = vunpack.c.l.b16 %v103
  %v136 = vunpack.c.l.b16 %v104
  %v137 = vpack.c.b16 %v122, %v121
  %v138 = vpack.c.b16 %v124, %v123
  %v139 = vpack.c.b16 %v126, %v125
  %v140 = vpack.c.b16 %v128, %v127
  %v141 = vpack.c.b16 %v130, %v129
  %v142 = vpack.c.b16 %v132, %v131
  %v143 = vpack.c.b16 %v134, %v133
  %v144 = vpack.c.b16 %v136, %v135
  %153 = vmatprep.subr.bf16.mxu0 0
  %154 = vmatpush1.bf16.msra.mxu0 %v137
  %155 = vmatprep.subr.bf16.mxu0 0
  %156 = vmatpush1.bf16.msra.mxu0 %v138
  %157 = vmatprep.subr.bf16.mxu0 0
  %158 = vmatpush1.bf16.msra.mxu0 %v139
  %159 = vmatprep.subr.bf16.mxu0 0
  %160 = vmatpush1.bf16.msra.mxu0 %v140
  %161 = vmatprep.subr.bf16.mxu0 0
  %162 = vmatpush1.bf16.msra.mxu0 %v141
  %163 = vmatprep.subr.bf16.mxu0 0
  %164 = vmatpush1.bf16.msra.mxu0 %v142
  %165 = vmatprep.subr.bf16.mxu0 0
  %166 = vmatpush1.bf16.msra.mxu0 %v143
  %167 = vmatprep.subr.bf16.mxu0 0
  %168 = vmatpush1.bf16.msra.mxu0 %v144
  %169 = vmatprep.subr.bf16.mxu0 0
  %170 = vmatpush1.bf16.msra.mxu0 0
  %171 = vmatprep.subr.bf16.mxu0 0
  %172 = vmatpush1.bf16.msra.mxu0 0
  %173 = vmatprep.subr.bf16.mxu0 0
  %174 = vmatpush1.bf16.msra.mxu0 0
  %175 = vmatprep.subr.bf16.mxu0 0
  %176 = vmatpush1.bf16.msra.mxu0 0
  %177 = vmatprep.subr.bf16.mxu0 0
  %178 = vmatpush1.bf16.msra.mxu0 0
  %179 = vmatprep.subr.bf16.mxu0 0
  %180 = vmatpush1.bf16.msra.mxu0 0
  %181 = vmatprep.subr.bf16.mxu0 0
  %182 = vmatpush1.bf16.msra.mxu0 0
  %183 = vmatprep.subr.bf16.mxu0 0
  %184 = vmatpush1.bf16.msra.mxu0 0
  %185 = vmatprep.mubr.bf16.mxu0 0
  %186 = vmatmul.mubr.bf16.gmra.mrb[0].mxu0 %v85
  %v187 = vpop.f32.mrb[0].mxu0
  %v188 = vadd.f32 0.0, %v187
  %v189 = vpop.f32.mrb[0].mxu0
  %v190 = vpop.f32.mrb[0].mxu0
  %v191 = vadd.f32 0.0, %v190
  %v192 = vpop.f32.mrb[0].mxu0
  %193 = vmatprep.mubr.bf16.mxu0 0
  %194 = vmatmul.mubr.bf16.gmra.mrb[0].mxu0 %v86
  %v195 = vpop.f32.mrb[0].mxu0
  %v196 = vadd.f32 0.0, %v195
  %v197 = vpop.f32.mrb[0].mxu0
  %v198 = vpop.f32.mrb[0].mxu0
  %v199 = vadd.f32 0.0, %v198
  %v200 = vpop.f32.mrb[0].mxu0
  %201 = vmatprep.mubr.bf16.mxu0 0
  %202 = vmatmul.mubr.bf16.gmra.mrb[0].mxu0 %v87
  %v203 = vpop.f32.mrb[0].mxu0
  %v204 = vadd.f32 0.0, %v203
  %v205 = vpop.f32.mrb[0].mxu0
  %v206 = vpop.f32.mrb[0].mxu0
  %v207 = vadd.f32 0.0, %v206
  %v208 = vpop.f32.mrb[0].mxu0
  %209 = vmatprep.mubr.bf16.mxu0 0
  %210 = vmatmul.mubr.bf16.gmra.mrb[0].mxu0 %v88
  %v211 = vpop.f32.mrb[0].mxu0
  %v212 = vadd.f32 0.0, %v211
  %v213 = vpop.f32.mrb[0].mxu0
  %v214 = vpop.f32.mrb[0].mxu0
  %v215 = vadd.f32 0.0, %v214
  %v216 = vpop.f32.mrb[0].mxu0
  %217 = vdwg.mxu0
  %v218 = vpack.c.bf16 %v191, %v188
  %v219 = vpack.c.bf16 %v199, %v196
  %v220 = vpack.c.bf16 %v207, %v204
  %v221 = vpack.c.bf16 %v215, %v212
  %v222 = vld [vmem:[%s2] sm:$0xff]
  %v223 = vld [vmem:[%s2 + $0x8] sm:$0xff]
  %v224 = vld [vmem:[%s2 + $0x10] sm:$0xff]
  %v225 = vld [vmem:[%s2 + $0x18] sm:$0xff]
  %v226 = vld [vmem:[%s2 + $0x20] sm:$0xff]
  %v227 = vld [vmem:[%s2 + $0x28] sm:$0xff]
  %v228 = vld [vmem:[%s2 + $0x30] sm:$0xff]
  %v229 = vld [vmem:[%s2 + $0x38] sm:$0xff]
  %v230 = vld [vmem:[%s2 + $0x40] sm:$0xff]
  %v231 = vld [vmem:[%s2 + $0x48] sm:$0xff]
  %v232 = vld [vmem:[%s2 + $0x50] sm:$0xff]
  %v233 = vld [vmem:[%s2 + $0x58] sm:$0xff]
  %v234 = vld [vmem:[%s2 + $0x60] sm:$0xff]
  %v235 = vld [vmem:[%s2 + $0x68] sm:$0xff]
  %v236 = vld [vmem:[%s2 + $0x70] sm:$0xff]
  %v237 = vld [vmem:[%s2 + $0x78] sm:$0xff]
  %v238 = vld [vmem:[%s2 + $0x80] sm:$0xff]
  %v239 = vld [vmem:[%s2 + $0x88] sm:$0xff]
  %v240 = vld [vmem:[%s2 + $0x90] sm:$0xff]
  %v241 = vld [vmem:[%s2 + $0x98] sm:$0xff]
  %v242 = vld [vmem:[%s2 + $0xa0] sm:$0xff]
  %v243 = vld [vmem:[%s2 + $0xa8] sm:$0xff]
  %v244 = vld [vmem:[%s2 + $0xb0] sm:$0xff]
  %v245 = vld [vmem:[%s2 + $0xb8] sm:$0xff]
  %v246 = vld [vmem:[%s2 + $0xc0] sm:$0xff]
  %v247 = vld [vmem:[%s2 + $0xc8] sm:$0xff]
  %v248 = vld [vmem:[%s2 + $0xd0] sm:$0xff]
  %v249 = vld [vmem:[%s2 + $0xd8] sm:$0xff]
  %v250 = vld [vmem:[%s2 + $0xe0] sm:$0xff]
  %v251 = vld [vmem:[%s2 + $0xe8] sm:$0xff]
  %v252 = vld [vmem:[%s2 + $0xf0] sm:$0xff]
  %v253 = vld [vmem:[%s2 + $0xf8] sm:$0xff]
  %v254 = vld [vmem:[%s4] sm:$0xf]
  %v256 = vlaneseq
  %v257 = vshrl.u32 %v256, 7
  %v258 = vsub.s32 0, %v257
  %v259 = vrot.slane %v254, %v258
  %v260 = vlaneseq
  %v261 = vshrl.u32 %v260, 7
  %v262 = vsub.s32 1, %v261
  %v263 = vrot.slane %v254, %v262
  %v264 = vlaneseq
  %v265 = vshrl.u32 %v264, 7
  %v266 = vsub.s32 2, %v265
  %v267 = vrot.slane %v254, %v266
  %v268 = vlaneseq
  %v269 = vshrl.u32 %v268, 7
  %v270 = vsub.s32 3, %v269
  %v271 = vrot.slane %v254, %v270
  %v308 = vunpack.c.l.b16 %v222
  %v309 = vunpack.c.h.b16 %v222
  %v310 = vunpack.c.l.b16 %v223
  %v311 = vunpack.c.h.b16 %v223
  %v312 = vunpack.c.l.b16 %v224
  %v313 = vunpack.c.h.b16 %v224
  %v314 = vunpack.c.l.b16 %v225
  %v315 = vunpack.c.h.b16 %v225
  %v316 = vunpack.c.l.b16 %v226
  %v317 = vunpack.c.h.b16 %v226
  %v318 = vunpack.c.l.b16 %v227
  %v319 = vunpack.c.h.b16 %v227
  %v320 = vunpack.c.l.b16 %v228
  %v321 = vunpack.c.h.b16 %v228
  %v322 = vunpack.c.l.b16 %v229
  %v323 = vunpack.c.h.b16 %v229
  %v324 = vunpack.c.l.b16 %v230
  %v325 = vunpack.c.h.b16 %v230
  %v326 = vunpack.c.l.b16 %v231
  %v327 = vunpack.c.h.b16 %v231
  %v328 = vunpack.c.l.b16 %v232
  %v329 = vunpack.c.h.b16 %v232
  %v330 = vunpack.c.l.b16 %v233
  %v331 = vunpack.c.h.b16 %v233
  %v332 = vunpack.c.l.b16 %v234
  %v333 = vunpack.c.h.b16 %v234
  %v334 = vunpack.c.l.b16 %v235
  %v335 = vunpack.c.h.b16 %v235
  %v336 = vunpack.c.l.b16 %v236
  %v337 = vunpack.c.h.b16 %v236
  %v338 = vunpack.c.l.b16 %v237
  %v339 = vunpack.c.h.b16 %v237
  %v340 = vunpack.c.l.b16 %v238
  %v341 = vunpack.c.h.b16 %v238
  %v342 = vunpack.c.l.b16 %v239
  %v343 = vunpack.c.h.b16 %v239
  %v344 = vunpack.c.l.b16 %v240
  %v345 = vunpack.c.h.b16 %v240
  %v346 = vunpack.c.l.b16 %v241
  %v347 = vunpack.c.h.b16 %v241
  %v348 = vunpack.c.l.b16 %v242
  %v349 = vunpack.c.h.b16 %v242
  %v350 = vunpack.c.l.b16 %v243
  %v351 = vunpack.c.h.b16 %v243
  %v352 = vunpack.c.l.b16 %v244
  %v353 = vunpack.c.h.b16 %v244
  %v354 = vunpack.c.l.b16 %v245
  %v355 = vunpack.c.h.b16 %v245
  %v356 = vunpack.c.l.b16 %v246
  %v357 = vunpack.c.h.b16 %v246
  %v358 = vunpack.c.l.b16 %v247
  %v359 = vunpack.c.h.b16 %v247
  %v360 = vunpack.c.l.b16 %v248
  %v361 = vunpack.c.h.b16 %v248
  %v362 = vunpack.c.l.b16 %v249
  %v363 = vunpack.c.h.b16 %v249
  %v364 = vunpack.c.l.b16 %v250
  %v365 = vunpack.c.h.b16 %v250
  %v366 = vunpack.c.l.b16 %v251
  %v367 = vunpack.c.h.b16 %v251
  %v368 = vunpack.c.l.b16 %v252
  %v369 = vunpack.c.h.b16 %v252
  %v370 = vunpack.c.l.b16 %v253
  %v371 = vunpack.c.h.b16 %v253
  %v372 = vpack.c.b16 %v312, %v308
  %v373 = vpack.c.b16 %v313, %v309
  %v374 = vpack.c.b16 %v314, %v310
  %v375 = vpack.c.b16 %v315, %v311
  %v376 = vpack.c.b16 %v320, %v316
  %v377 = vpack.c.b16 %v321, %v317
  %v378 = vpack.c.b16 %v322, %v318
  %v379 = vpack.c.b16 %v323, %v319
  %v380 = vpack.c.b16 %v328, %v324
  %v381 = vpack.c.b16 %v329, %v325
  %v382 = vpack.c.b16 %v330, %v326
  %v383 = vpack.c.b16 %v331, %v327
  %v384 = vpack.c.b16 %v336, %v332
  %v385 = vpack.c.b16 %v337, %v333
  %v386 = vpack.c.b16 %v338, %v334
  %v387 = vpack.c.b16 %v339, %v335
  %v388 = vpack.c.b16 %v344, %v340
  %v389 = vpack.c.b16 %v345, %v341
  %v390 = vpack.c.b16 %v346, %v342
  %v391 = vpack.c.b16 %v347, %v343
  %v392 = vpack.c.b16 %v352, %v348
  %v393 = vpack.c.b16 %v353, %v349
  %v394 = vpack.c.b16 %v354, %v350
  %v395 = vpack.c.b16 %v355, %v351
  %v396 = vpack.c.b16 %v360, %v356
  %v397 = vpack.c.b16 %v361, %v357
  %v398 = vpack.c.b16 %v362, %v358
  %v399 = vpack.c.b16 %v363, %v359
  %v400 = vpack.c.b16 %v368, %v364
  %v401 = vpack.c.b16 %v369, %v365
  %v402 = vpack.c.b16 %v370, %v366
  %v403 = vpack.c.b16 %v371, %v367
  %436 = vmatprep.subr.bf16.mxu0 %v373
  %437 = vmatpush1.bf16.msra.mxu0 %v372
  %438 = vmatprep.subr.bf16.mxu0 %v377
  %439 = vmatpush1.bf16.msra.mxu0 %v376
  %440 = vmatprep.subr.bf16.mxu0 %v381
  %441 = vmatpush1.bf16.msra.mxu0 %v380
  %442 = vmatprep.subr.bf16.mxu0 %v385
  %443 = vmatpush1.bf16.msra.mxu0 %v384
  %444 = vmatprep.subr.bf16.mxu0 %v389
  %445 = vmatpush1.bf16.msra.mxu0 %v388
  %446 = vmatprep.subr.bf16.mxu0 %v393
  %447 = vmatpush1.bf16.msra.mxu0 %v392
  %448 = vmatprep.subr.bf16.mxu0 %v397
  %449 = vmatpush1.bf16.msra.mxu0 %v396
  %450 = vmatprep.subr.bf16.mxu0 %v401
  %451 = vmatpush1.bf16.msra.mxu0 %v400
  %452 = vmatprep.subr.bf16.mxu0 0
  %453 = vmatpush1.bf16.msra.mxu0 0
  %454 = vmatprep.subr.bf16.mxu0 0
  %455 = vmatpush1.bf16.msra.mxu0 0
  %456 = vmatprep.subr.bf16.mxu0 0
  %457 = vmatpush1.bf16.msra.mxu0 0
  %458 = vmatprep.subr.bf16.mxu0 0
  %459 = vmatpush1.bf16.msra.mxu0 0
  %460 = vmatprep.subr.bf16.mxu0 0
  %461 = vmatpush1.bf16.msra.mxu0 0
  %462 = vmatprep.subr.bf16.mxu0 0
  %463 = vmatpush1.bf16.msra.mxu0 0
  %464 = vmatprep.subr.bf16.mxu0 0
  %465 = vmatpush1.bf16.msra.mxu0 0
  %466 = vmatprep.subr.bf16.mxu0 0
  %467 = vmatpush1.bf16.msra.mxu0 0
  %468 = vmatprep.mubr.bf16.mxu0 0
  %469 = vmatmul.mubr.bf16.gmra.mrb[0].mxu0 %v218
  %v470 = vpop.f32.mrb[0].mxu0
  %v471 = vadd.f32 %v259, %v470
  %v472 = vpop.f32.mrb[0].mxu0
  %v473 = vadd.f32 %v263, %v472
  %v474 = vpop.f32.mrb[0].mxu0
  %v475 = vadd.f32 %v259, %v474
  %v476 = vpop.f32.mrb[0].mxu0
  %v477 = vadd.f32 %v263, %v476
  %478 = vmatprep.mubr.bf16.mxu0 0
  %479 = vmatmul.mubr.bf16.gmra.mrb[0].mxu0 %v219
  %v480 = vpop.f32.mrb[0].mxu0
  %v481 = vadd.f32 %v259, %v480
  %v482 = vpop.f32.mrb[0].mxu0
  %v483 = vadd.f32 %v263, %v482
  %v484 = vpop.f32.mrb[0].mxu0
  %v485 = vadd.f32 %v259, %v484
  %v486 = vpop.f32.mrb[0].mxu0
  %v487 = vadd.f32 %v263, %v486
  %488 = vmatprep.mubr.bf16.mxu0 0
  %489 = vmatmul.mubr.bf16.gmra.mrb[0].mxu0 %v220
  %v490 = vpop.f32.mrb[0].mxu0
  %v491 = vadd.f32 %v259, %v490
  %v492 = vpop.f32.mrb[0].mxu0
  %v493 = vadd.f32 %v263, %v492
  %v494 = vpop.f32.mrb[0].mxu0
  %v495 = vadd.f32 %v259, %v494
  %v496 = vpop.f32.mrb[0].mxu0
  %v497 = vadd.f32 %v263, %v496
  %498 = vmatprep.mubr.bf16.mxu0 0
  %499 = vmatmul.mubr.bf16.gmra.mrb[0].mxu0 %v221
  %v500 = vpop.f32.mrb[0].mxu0
  %v501 = vadd.f32 %v259, %v500
  %v502 = vpop.f32.mrb[0].mxu0
  %v503 = vadd.f32 %v263, %v502
  %v504 = vpop.f32.mrb[0].mxu0
  %v505 = vadd.f32 %v259, %v504
  %v506 = vpop.f32.mrb[0].mxu0
  %v507 = vadd.f32 %v263, %v506
  %508 = vdwg.mxu0
  %509 = vmatprep.subr.bf16.mxu0 %v375
  %510 = vmatpush1.bf16.msra.mxu0 %v374
  %511 = vmatprep.subr.bf16.mxu0 %v379
  %512 = vmatpush1.bf16.msra.mxu0 %v378
  %513 = vmatprep.subr.bf16.mxu0 %v383
  %514 = vmatpush1.bf16.msra.mxu0 %v382
  %515 = vmatprep.subr.bf16.mxu0 %v387
  %516 = vmatpush1.bf16.msra.mxu0 %v386
  %517 = vmatprep.subr.bf16.mxu0 %v391
  %518 = vmatpush1.bf16.msra.mxu0 %v390
  %519 = vmatprep.subr.bf16.mxu0 %v395
  %520 = vmatpush1.bf16.msra.mxu0 %v394
  %521 = vmatprep.subr.bf16.mxu0 %v399
  %522 = vmatpush1.bf16.msra.mxu0 %v398
  %523 = vmatprep.subr.bf16.mxu0 %v403
  %524 = vmatpush1.bf16.msra.mxu0 %v402
  %525 = vmatprep.subr.bf16.mxu0 0
  %526 = vmatpush1.bf16.msra.mxu0 0
  %527 = vmatprep.subr.bf16.mxu0 0
  %528 = vmatpush1.bf16.msra.mxu0 0
  %529 = vmatprep.subr.bf16.mxu0 0
  %530 = vmatpush1.bf16.msra.mxu0 0
  %531 = vmatprep.subr.bf16.mxu0 0
  %532 = vmatpush1.bf16.msra.mxu0 0
  %533 = vmatprep.subr.bf16.mxu0 0
  %534 = vmatpush1.bf16.msra.mxu0 0
  %535 = vmatprep.subr.bf16.mxu0 0
  %536 = vmatpush1.bf16.msra.mxu0 0
  %537 = vmatprep.subr.bf16.mxu0 0
  %538 = vmatpush1.bf16.msra.mxu0 0
  %539 = vmatprep.subr.bf16.mxu0 0
  %540 = vmatpush1.bf16.msra.mxu0 0
  %541 = vmatprep.mubr.bf16.mxu0 0
  %542 = vmatmul.mubr.bf16.gmra.mrb[0].mxu0 %v218
  %v543 = vpop.f32.mrb[0].mxu0
  %v544 = vadd.f32 %v267, %v543
  %v545 = vpop.f32.mrb[0].mxu0
  %v546 = vadd.f32 %v271, %v545
  %v547 = vpop.f32.mrb[0].mxu0
  %v548 = vadd.f32 %v267, %v547
  %v549 = vpop.f32.mrb[0].mxu0
  %v550 = vadd.f32 %v271, %v549
  %551 = vmatprep.mubr.bf16.mxu0 0
  %552 = vmatmul.mubr.bf16.gmra.mrb[0].mxu0 %v219
  %v553 = vpop.f32.mrb[0].mxu0
  %v554 = vadd.f32 %v267, %v553
  %v555 = vpop.f32.mrb[0].mxu0
  %v556 = vadd.f32 %v271, %v555
  %v557 = vpop.f32.mrb[0].mxu0
  %v558 = vadd.f32 %v267, %v557
  %v559 = vpop.f32.mrb[0].mxu0
  %v560 = vadd.f32 %v271, %v559
  %561 = vmatprep.mubr.bf16.mxu0 0
  %562 = vmatmul.mubr.bf16.gmra.mrb[0].mxu0 %v220
  %v563 = vpop.f32.mrb[0].mxu0
  %v564 = vadd.f32 %v267, %v563
  %v565 = vpop.f32.mrb[0].mxu0
  %v566 = vadd.f32 %v271, %v565
  %v567 = vpop.f32.mrb[0].mxu0
  %v568 = vadd.f32 %v267, %v567
  %v569 = vpop.f32.mrb[0].mxu0
  %v570 = vadd.f32 %v271, %v569
  %571 = vmatprep.mubr.bf16.mxu0 0
  %572 = vmatmul.mubr.bf16.gmra.mrb[0].mxu0 %v221
  %v573 = vpop.f32.mrb[0].mxu0
  %v574 = vadd.f32 %v267, %v573
  %v575 = vpop.f32.mrb[0].mxu0
  %v576 = vadd.f32 %v271, %v575
  %v577 = vpop.f32.mrb[0].mxu0
  %v578 = vadd.f32 %v267, %v577
  %v579 = vpop.f32.mrb[0].mxu0
  %v580 = vadd.f32 %v271, %v579
  %581 = vdwg.mxu0
  %582 = vst [vmem:[#allocation2] sm:$0xff] %v471
  %583 = vst [vmem:[#allocation2 + $0x8] sm:$0xff] %v473
  %584 = vst [vmem:[#allocation2 + $0x10] sm:$0xff] %v544
  %585 = vst [vmem:[#allocation2 + $0x18] sm:$0xff] %v546
  %586 = vst [vmem:[#allocation2 + $0x20] sm:$0xff] %v475
  %587 = vst [vmem:[#allocation2 + $0x28] sm:$0xff] %v477
  %588 = vst [vmem:[#allocation2 + $0x30] sm:$0xff] %v548
  %589 = vst [vmem:[#allocation2 + $0x38] sm:$0xff] %v550
  %590 = vst [vmem:[#allocation2 + $0x40] sm:$0xff] %v481
  %591 = vst [vmem:[#allocation2 + $0x48] sm:$0xff] %v483
  %592 = vst [vmem:[#allocation2 + $0x50] sm:$0xff] %v554
  %593 = vst [vmem:[#allocation2 + $0x58] sm:$0xff] %v556
  %594 = vst [vmem:[#allocation2 + $0x60] sm:$0xff] %v485
  %595 = vst [vmem:[#allocation2 + $0x68] sm:$0xff] %v487
  %596 = vst [vmem:[#allocation2 + $0x70] sm:$0xff] %v558
  %597 = vst [vmem:[#allocation2 + $0x78] sm:$0xff] %v560
  %598 = vst [vmem:[#allocation2 + $0x80] sm:$0xff] %v491
  %599 = vst [vmem:[#allocation2 + $0x88] sm:$0xff] %v493
  %600 = vst [vmem:[#allocation2 + $0x90] sm:$0xff] %v564
  %601 = vst [vmem:[#allocation2 + $0x98] sm:$0xff] %v566
  %602 = vst [vmem:[#allocation2 + $0xa0] sm:$0xff] %v495
  %603 = vst [vmem:[#allocation2 + $0xa8] sm:$0xff] %v497
  %604 = vst [vmem:[#allocation2 + $0xb0] sm:$0xff] %v568
  %605 = vst [vmem:[#allocation2 + $0xb8] sm:$0xff] %v570
  %606 = vst [vmem:[#allocation2 + $0xc0] sm:$0xff] %v501
  %607 = vst [vmem:[#allocation2 + $0xc8] sm:$0xff] %v503
  %608 = vst [vmem:[#allocation2 + $0xd0] sm:$0xff] %v574
  %609 = vst [vmem:[#allocation2 + $0xd8] sm:$0xff] %v576
  %610 = vst [vmem:[#allocation2 + $0xe0] sm:$0xff] %v505
  %611 = vst [vmem:[#allocation2 + $0xe8] sm:$0xff] %v507
  %612 = vst [vmem:[#allocation2 + $0xf0] sm:$0xff] %v578
  %613 = vst [vmem:[#allocation2 + $0xf8] sm:$0xff] %v580
  %s614 = smul.u32 0, 4
  %s615 = smul.addr %s614, 8
  %s616 = scalar_lea.vmem [#allocation2], %s615
  %v617 = vld [vmem:[%s616] sm:$0xff]
  %v618 = vld [vmem:[%s616 + $0x8] sm:$0xff]
  %v619 = vld [vmem:[%s616 + $0x10] sm:$0xff]
  %v620 = vld [vmem:[%s616 + $0x18] sm:$0xff]
  %v621 = vld [vmem:[%s3] sm:$0xff]
  %v622 = vld [vmem:[%s3 + $0x8] sm:$0xff]
  %v623 = vld [vmem:[%s3 + $0x10] sm:$0xff]
  %v624 = vld [vmem:[%s3 + $0x18] sm:$0xff]
  %v625 = vld [vmem:[%s3 + $0x20] sm:$0xff]
  %v626 = vld [vmem:[%s3 + $0x28] sm:$0xff]
  %v627 = vld [vmem:[%s3 + $0x30] sm:$0xff]
  %v628 = vld [vmem:[%s3 + $0x38] sm:$0xff]
  %v629 = vld [vmem:[%s3 + $0x40] sm:$0xff]
  %v630 = vld [vmem:[%s3 + $0x48] sm:$0xff]
  %v631 = vld [vmem:[%s3 + $0x50] sm:$0xff]
  %v632 = vld [vmem:[%s3 + $0x58] sm:$0xff]
  %v633 = vld [vmem:[%s3 + $0x60] sm:$0xff]
  %v634 = vld [vmem:[%s3 + $0x68] sm:$0xff]
  %v635 = vld [vmem:[%s3 + $0x70] sm:$0xff]
  %v636 = vld [vmem:[%s3 + $0x78] sm:$0xff]
  %v637 = vld [vmem:[%s3 + $0x80] sm:$0xff]
  %v638 = vld [vmem:[%s3 + $0x88] sm:$0xff]
  %v639 = vld [vmem:[%s3 + $0x90] sm:$0xff]
  %v640 = vld [vmem:[%s3 + $0x98] sm:$0xff]
  %v641 = vld [vmem:[%s3 + $0xa0] sm:$0xff]
  %v642 = vld [vmem:[%s3 + $0xa8] sm:$0xff]
  %v643 = vld [vmem:[%s3 + $0xb0] sm:$0xff]
  %v644 = vld [vmem:[%s3 + $0xb8] sm:$0xff]
  %v645 = vld [vmem:[%s3 + $0xc0] sm:$0xff]
  %v646 = vld [vmem:[%s3 + $0xc8] sm:$0xff]
  %v647 = vld [vmem:[%s3 + $0xd0] sm:$0xff]
  %v648 = vld [vmem:[%s3 + $0xd8] sm:$0xff]
  %v649 = vld [vmem:[%s3 + $0xe0] sm:$0xff]
  %v650 = vld [vmem:[%s3 + $0xe8] sm:$0xff]
  %v651 = vld [vmem:[%s3 + $0xf0] sm:$0xff]
  %v652 = vld [vmem:[%s3 + $0xf8] sm:$0xff]
  %v685 = vunpack.c.l.b16 %v621
  %v686 = vunpack.c.h.b16 %v621
  %v687 = vunpack.c.l.b16 %v622
  %v688 = vunpack.c.h.b16 %v622
  %v689 = vunpack.c.l.b16 %v623
  %v690 = vunpack.c.h.b16 %v623
  %v691 = vunpack.c.l.b16 %v624
  %v692 = vunpack.c.h.b16 %v624
  %v693 = vunpack.c.l.b16 %v625
  %v694 = vunpack.c.h.b16 %v625
  %v695 = vunpack.c.l.b16 %v626
  %v696 = vunpack.c.h.b16 %v626
  %v697 = vunpack.c.l.b16 %v627
  %v698 = vunpack.c.h.b16 %v627
  %v699 = vunpack.c.l.b16 %v628
  %v700 = vunpack.c.h.b16 %v628
  %v701 = vunpack.c.l.b16 %v629
  %v702 = vunpack.c.h.b16 %v629
  %v703 = vunpack.c.l.b16 %v630
  %v704 = vunpack.c.h.b16 %v630
  %v705 = vunpack.c.l.b16 %v631
  %v706 = vunpack.c.h.b16 %v631
  %v707 = vunpack.c.l.b16 %v632
  %v708 = vunpack.c.h.b16 %v632
  %v709 = vunpack.c.l.b16 %v633
  %v710 = vunpack.c.h.b16 %v633
  %v711 = vunpack.c.l.b16 %v634
  %v712 = vunpack.c.h.b16 %v634
  %v713 = vunpack.c.l.b16 %v635
  %v714 = vunpack.c.h.b16 %v635
  %v715 = vunpack.c.l.b16 %v636
  %v716 = vunpack.c.h.b16 %v636
  %v717 = vunpack.c.l.b16 %v637
  %v718 = vunpack.c.h.b16 %v637
  %v719 = vunpack.c.l.b16 %v638
  %v720 = vunpack.c.h.b16 %v638
  %v721 = vunpack.c.l.b16 %v639
  %v722 = vunpack.c.h.b16 %v639
  %v723 = vunpack.c.l.b16 %v640
  %v724 = vunpack.c.h.b16 %v640
  %v725 = vunpack.c.l.b16 %v641
  %v726 = vunpack.c.h.b16 %v641
  %v727 = vunpack.c.l.b16 %v642
  %v728 = vunpack.c.h.b16 %v642
  %v729 = vunpack.c.l.b16 %v643
  %v730 = vunpack.c.h.b16 %v643
  %v731 = vunpack.c.l.b16 %v644
  %v732 = vunpack.c.h.b16 %v644
  %v733 = vunpack.c.l.b16 %v645
  %v734 = vunpack.c.h.b16 %v645
  %v735 = vunpack.c.l.b16 %v646
  %v736 = vunpack.c.h.b16 %v646
  %v737 = vunpack.c.l.b16 %v647
  %v738 = vunpack.c.h.b16 %v647
  %v739 = vunpack.c.l.b16 %v648
  %v740 = vunpack.c.h.b16 %v648
  %v741 = vunpack.c.l.b16 %v649
  %v742 = vunpack.c.h.b16 %v649
  %v743 = vunpack.c.l.b16 %v650
  %v744 = vunpack.c.h.b16 %v650
  %v745 = vunpack.c.l.b16 %v651
  %v746 = vunpack.c.h.b16 %v651
  %v747 = vunpack.c.l.b16 %v652
  %v748 = vunpack.c.h.b16 %v652
  %v749 = vpack.c.b16 %v689, %v685
  %v750 = vpack.c.b16 %v690, %v686
  %v751 = vpack.c.b16 %v691, %v687
  %v752 = vpack.c.b16 %v692, %v688
  %v753 = vpack.c.b16 %v697, %v693
  %v754 = vpack.c.b16 %v698, %v694
  %v755 = vpack.c.b16 %v699, %v695
  %v756 = vpack.c.b16 %v700, %v696
  %v757 = vpack.c.b16 %v705, %v701
  %v758 = vpack.c.b16 %v706, %v702
  %v759 = vpack.c.b16 %v707, %v703
  %v760 = vpack.c.b16 %v708, %v704
  %v761 = vpack.c.b16 %v713, %v709
  %v762 = vpack.c.b16 %v714, %v710
  %v763 = vpack.c.b16 %v715, %v711
  %v764 = vpack.c.b16 %v716, %v712
  %v765 = vpack.c.b16 %v721, %v717
  %v766 = vpack.c.b16 %v722, %v718
  %v767 = vpack.c.b16 %v723, %v719
  %v768 = vpack.c.b16 %v724, %v720
  %v769 = vpack.c.b16 %v729, %v725
  %v770 = vpack.c.b16 %v730, %v726
  %v771 = vpack.c.b16 %v731, %v727
  %v772 = vpack.c.b16 %v732, %v728
  %v773 = vpack.c.b16 %v737, %v733
  %v774 = vpack.c.b16 %v738, %v734
  %v775 = vpack.c.b16 %v739, %v735
  %v776 = vpack.c.b16 %v740, %v736
  %v777 = vpack.c.b16 %v745, %v741
  %v778 = vpack.c.b16 %v746, %v742
  %v779 = vpack.c.b16 %v747, %v743
  %v780 = vpack.c.b16 %v748, %v744
  %813 = vmatprep.subr.bf16.mxu0 %v750
  %814 = vmatpush1.bf16.msra.mxu0 %v749
  %815 = vmatprep.subr.bf16.mxu0 %v754
  %816 = vmatpush1.bf16.msra.mxu0 %v753
  %817 = vmatprep.subr.bf16.mxu0 %v758
  %818 = vmatpush1.bf16.msra.mxu0 %v757
  %819 = vmatprep.subr.bf16.mxu0 %v762
  %820 = vmatpush1.bf16.msra.mxu0 %v761
  %821 = vmatprep.subr.bf16.mxu0 %v766
  %822 = vmatpush1.bf16.msra.mxu0 %v765
  %823 = vmatprep.subr.bf16.mxu0 %v770
  %824 = vmatpush1.bf16.msra.mxu0 %v769
  %825 = vmatprep.subr.bf16.mxu0 %v774
  %826 = vmatpush1.bf16.msra.mxu0 %v773
  %827 = vmatprep.subr.bf16.mxu0 %v778
  %828 = vmatpush1.bf16.msra.mxu0 %v777
  %829 = vmatprep.subr.bf16.mxu0 0
  %830 = vmatpush1.bf16.msra.mxu0 0
  %831 = vmatprep.subr.bf16.mxu0 0
  %832 = vmatpush1.bf16.msra.mxu0 0
  %833 = vmatprep.subr.bf16.mxu0 0
  %834 = vmatpush1.bf16.msra.mxu0 0
  %835 = vmatprep.subr.bf16.mxu0 0
  %836 = vmatpush1.bf16.msra.mxu0 0
  %837 = vmatprep.subr.bf16.mxu0 0
  %838 = vmatpush1.bf16.msra.mxu0 0
  %839 = vmatprep.subr.bf16.mxu0 0
  %840 = vmatpush1.bf16.msra.mxu0 0
  %841 = vmatprep.subr.bf16.mxu0 0
  %842 = vmatpush1.bf16.msra.mxu0 0
  %843 = vmatprep.subr.bf16.mxu0 0
  %844 = vmatpush1.bf16.msra.mxu0 0
  %845 = vmatprep.mubr.bf16.mxu0 0
  %846 = vmatmul.mubr.bf16.gmra.mrb[0].mxu0 0
  %v847 = vpop.f32.mrb[0].mxu0
  %v848 = vadd.f32 0.0, %v847
  %v849 = vpop.f32.mrb[0].mxu0
  %v850 = vadd.f32 0.0, %v849
  %v851 = vpop.f32.mrb[0].mxu0
  %v852 = vpop.f32.mrb[0].mxu0
  %853 = vdwg.mxu0
  %854 = vmatprep.subr.bf16.mxu0 %v752
  %855 = vmatpush1.bf16.msra.mxu0 %v751
  %856 = vmatprep.subr.bf16.mxu0 %v756
  %857 = vmatpush1.bf16.msra.mxu0 %v755
  %858 = vmatprep.subr.bf16.mxu0 %v760
  %859 = vmatpush1.bf16.msra.mxu0 %v759
  %860 = vmatprep.subr.bf16.mxu0 %v764
  %861 = vmatpush1.bf16.msra.mxu0 %v763
  %862 = vmatprep.subr.bf16.mxu0 %v768
  %863 = vmatpush1.bf16.msra.mxu0 %v767
  %864 = vmatprep.subr.bf16.mxu0 %v772
  %865 = vmatpush1.bf16.msra.mxu0 %v771
  %866 = vmatprep.subr.bf16.mxu0 %v776
  %867 = vmatpush1.bf16.msra.mxu0 %v775
  %868 = vmatprep.subr.bf16.mxu0 %v780
  %869 = vmatpush1.bf16.msra.mxu0 %v779
  %870 = vmatprep.subr.bf16.mxu0 0
  %871 = vmatpush1.bf16.msra.mxu0 0
  %872 = vmatprep.subr.bf16.mxu0 0
  %873 = vmatpush1.bf16.msra.mxu0 0
  %874 = vmatprep.subr.bf16.mxu0 0
  %875 = vmatpush1.bf16.msra.mxu0 0
  %876 = vmatprep.subr.bf16.mxu0 0
  %877 = vmatpush1.bf16.msra.mxu0 0
  %878 = vmatprep.subr.bf16.mxu0 0
  %879 = vmatpush1.bf16.msra.mxu0 0
  %880 = vmatprep.subr.bf16.mxu0 0
  %881 = vmatpush1.bf16.msra.mxu0 0
  %882 = vmatprep.subr.bf16.mxu0 0
  %883 = vmatpush1.bf16.msra.mxu0 0
  %884 = vmatprep.subr.bf16.mxu0 0
  %885 = vmatpush1.bf16.msra.mxu0 0
  %886 = vmatprep.mubr.bf16.mxu0 0
  %887 = vmatmul.mubr.bf16.gmra.mrb[0].mxu0 0
  %v888 = vpop.f32.mrb[0].mxu0
  %v889 = vadd.f32 0.0, %v888
  %v890 = vpop.f32.mrb[0].mxu0
  %v891 = vadd.f32 0.0, %v890
  %v892 = vpop.f32.mrb[0].mxu0
  %v893 = vpop.f32.mrb[0].mxu0
  %894 = vdwg.mxu0
  %v895 = vadd.f32 %v617, %v848
  %v896 = vadd.f32 %v618, %v850
  %v897 = vadd.f32 %v619, %v889
  %v898 = vadd.f32 %v620, %v891
  %v899 = vxor.u32 %v895, 2147483648
  %v900 = vmul.f32 %v899, 1.442695
  %v901 = vpow.pop %v900
  %v902 = vadd.f32 %v901, 1.0
  %v903 = vrcp.pop %v902
  %v904 = vmul.f32 1.0, %v903
  %v905 = vxor.u32 %v896, 2147483648
  %v906 = vmul.f32 %v905, 1.442695
  %v907 = vpow.pop %v906
  %v908 = vadd.f32 %v907, 1.0
  %v909 = vrcp.pop %v908
  %v910 = vmul.f32 1.0, %v909
  %v911 = vtanh.pop %v897
  %v912 = vxor.u32 %v898, 2147483648
  %v913 = vmul.f32 %v912, 1.442695
  %v914 = vpow.pop %v913
  %v915 = vadd.f32 %v914, 1.0
  %v916 = vrcp.pop %v915
  %v917 = vmul.f32 1.0, %v916
  %v918 = vmul.f32 %v910, 0.0
  %v919 = vmul.f32 %v904, %v911
  %v920 = vadd.f32 %v918, %v919
  %v921 = vtanh.pop %v920
  %v922 = vmul.f32 %v917, %v921
  %s923 = smul.u32 1, 4
  %s924 = smul.addr %s923, 8
  %s925 = scalar_lea.vmem [#allocation2], %s924
  %v926 = vld [vmem:[%s925] sm:$0xff]
  %v927 = vld [vmem:[%s925 + $0x8] sm:$0xff]
  %v928 = vld [vmem:[%s925 + $0x10] sm:$0xff]
  %v929 = vld [vmem:[%s925 + $0x18] sm:$0xff]
  %v930 = vpack.c.bf16 %v922, %v922
  %931 = vmatprep.subr.bf16.mxu0 %v750
  %932 = vmatpush1.bf16.msra.mxu0 %v749
  %933 = vmatprep.subr.bf16.mxu0 %v754
  %934 = vmatpush1.bf16.msra.mxu0 %v753
  %935 = vmatprep.subr.bf16.mxu0 %v758
  %936 = vmatpush1.bf16.msra.mxu0 %v757
  %937 = vmatprep.subr.bf16.mxu0 %v762
  %938 = vmatpush1.bf16.msra.mxu0 %v761
  %939 = vmatprep.subr.bf16.mxu0 %v766
  %940 = vmatpush1.bf16.msra.mxu0 %v765
  %941 = vmatprep.subr.bf16.mxu0 %v770
  %942 = vmatpush1.bf16.msra.mxu0 %v769
  %943 = vmatprep.subr.bf16.mxu0 %v774
  %944 = vmatpush1.bf16.msra.mxu0 %v773
  %945 = vmatprep.subr.bf16.mxu0 %v778
  %946 = vmatpush1.bf16.msra.mxu0 %v777
  %947 = vmatprep.subr.bf16.mxu0 0
  %948 = vmatpush1.bf16.msra.mxu0 0
  %949 = vmatprep.subr.bf16.mxu0 0
  %950 = vmatpush1.bf16.msra.mxu0 0
  %951 = vmatprep.subr.bf16.mxu0 0
  %952 = vmatpush1.bf16.msra.mxu0 0
  %953 = vmatprep.subr.bf16.mxu0 0
  %954 = vmatpush1.bf16.msra.mxu0 0
  %955 = vmatprep.subr.bf16.mxu0 0
  %956 = vmatpush1.bf16.msra.mxu0 0
  %957 = vmatprep.subr.bf16.mxu0 0
  %958 = vmatpush1.bf16.msra.mxu0 0
  %959 = vmatprep.subr.bf16.mxu0 0
  %960 = vmatpush1.bf16.msra.mxu0 0
  %961 = vmatprep.subr.bf16.mxu0 0
  %962 = vmatpush1.bf16.msra.mxu0 0
  %963 = vmatprep.mubr.bf16.mxu0 0
  %964 = vmatmul.mubr.bf16.gmra.mrb[0].mxu0 %v930
  %v965 = vpop.f32.mrb[0].mxu0
  %v966 = vadd.f32 0.0, %v965
  %v967 = vpop.f32.mrb[0].mxu0
  %v968 = vadd.f32 0.0, %v967
  %v969 = vpop.f32.mrb[0].mxu0
  %v970 = vpop.f32.mrb[0].mxu0
  %971 = vdwg.mxu0
  %972 = vmatprep.subr.bf16.mxu0 %v752
  %973 = vmatpush1.bf16.msra.mxu0 %v751
  %974 = vmatprep.subr.bf16.mxu0 %v756
  %975 = vmatpush1.bf16.msra.mxu0 %v755
  %976 = vmatprep.subr.bf16.mxu0 %v760
  %977 = vmatpush1.bf16.msra.mxu0 %v759
  %978 = vmatprep.subr.bf16.mxu0 %v764
  %979 = vmatpush1.bf16.msra.mxu0 %v763
  %980 = vmatprep.subr.bf16.mxu0 %v768
  %981 = vmatpush1.bf16.msra.mxu0 %v767
  %982 = vmatprep.subr.bf16.mxu0 %v772
  %983 = vmatpush1.bf16.msra.mxu0 %v771
  %984 = vmatprep.subr.bf16.mxu0 %v776
  %985 = vmatpush1.bf16.msra.mxu0 %v775
  %986 = vmatprep.subr.bf16.mxu0 %v780
  %987 = vmatpush1.bf16.msra.mxu0 %v779
  %988 = vmatprep.subr.bf16.mxu0 0
  %989 = vmatpush1.bf16.msra.mxu0 0
  %990 = vmatprep.subr.bf16.mxu0 0
  %991 = vmatpush1.bf16.msra.mxu0 0
  %992 = vmatprep.subr.bf16.mxu0 0
  %993 = vmatpush1.bf16.msra.mxu0 0
  %994 = vmatprep.subr.bf16.mxu0 0
  %995 = vmatpush1.bf16.msra.mxu0 0
  %996 = vmatprep.subr.bf16.mxu0 0
  %997 = vmatpush1.bf16.msra.mxu0 0
  %998 = vmatprep.subr.bf16.mxu0 0
  %999 = vmatpush1.bf16.msra.mxu0 0
  %1000 = vmatprep.subr.bf16.mxu0 0
  %1001 = vmatpush1.bf16.msra.mxu0 0
  %1002 = vmatprep.subr.bf16.mxu0 0
  %1003 = vmatpush1.bf16.msra.mxu0 0
  %1004 = vmatprep.mubr.bf16.mxu0 0
  %1005 = vmatmul.mubr.bf16.gmra.mrb[0].mxu0 %v930
  %v1006 = vpop.f32.mrb[0].mxu0
  %v1007 = vadd.f32 0.0, %v1006
  %v1008 = vpop.f32.mrb[0].mxu0
  %v1009 = vadd.f32 0.0, %v1008
  %v1010 = vpop.f32.mrb[0].mxu0
  %v1011 = vpop.f32.mrb[0].mxu0
  %1012 = vdwg.mxu0
  %v1013 = vadd.f32 %v926, %v966
  %v1014 = vadd.f32 %v927, %v968
  %v1015 = vadd.f32 %v928, %v1007
  %v1016 = vadd.f32 %v929, %v1009
  %v1017 = vxor.u32 %v1013, 2147483648
  %v1018 = vmul.f32 %v1017, 1.442695
  %v1019 = vpow.pop %v1018
  %v1020 = vadd.f32 %v1019, 1.0
  %v1021 = vrcp.pop %v1020
  %v1022 = vmul.f32 1.0, %v1021
  %v1023 = vxor.u32 %v1014, 2147483648
  %v1024 = vmul.f32 %v1023, 1.442695
  %v1025 = vpow.pop %v1024
  %v1026 = vadd.f32 %v1025, 1.0
  %v1027 = vrcp.pop %v1026
  %v1028 = vmul.f32 1.0, %v1027
  %v1029 = vtanh.pop %v1015
  %v1030 = vxor.u32 %v1016, 2147483648
  %v1031 = vmul.f32 %v1030, 1.442695
  %v1032 = vpow.pop %v1031
  %v1033 = vadd.f32 %v1032, 1.0
  %v1034 = vrcp.pop %v1033
  %v1035 = vmul.f32 1.0, %v1034
  %v1036 = vmul.f32 %v1028, %v920
  %v1037 = vmul.f32 %v1022, %v1029
  %v1038 = vadd.f32 %v1036, %v1037
  %v1039 = vtanh.pop %v1038
  %v1040 = vmul.f32 %v1035, %v1039
  %s1041 = smul.u32 2, 4
  %s1042 = smul.addr %s1041, 8
  %s1043 = scalar_lea.vmem [#allocation2], %s1042
  %v1044 = vld [vmem:[%s1043] sm:$0xff]
  %v1045 = vld [vmem:[%s1043 + $0x8] sm:$0xff]
  %v1046 = vld [vmem:[%s1043 + $0x10] sm:$0xff]
  %v1047 = vld [vmem:[%s1043 + $0x18] sm:$0xff]
  %v1048 = vpack.c.bf16 %v1040, %v1040
  %1049 = vmatprep.subr.bf16.mxu0 %v750
  %1050 = vmatpush1.bf16.msra.mxu0 %v749
  %1051 = vmatprep.subr.bf16.mxu0 %v754
  %1052 = vmatpush1.bf16.msra.mxu0 %v753
  %1053 = vmatprep.subr.bf16.mxu0 %v758
  %1054 = vmatpush1.bf16.msra.mxu0 %v757
  %1055 = vmatprep.subr.bf16.mxu0 %v762
  %1056 = vmatpush1.bf16.msra.mxu0 %v761
  %1057 = vmatprep.subr.bf16.mxu0 %v766
  %1058 = vmatpush1.bf16.msra.mxu0 %v765
  %1059 = vmatprep.subr.bf16.mxu0 %v770
  %1060 = vmatpush1.bf16.msra.mxu0 %v769
  %1061 = vmatprep.subr.bf16.mxu0 %v774
  %1062 = vmatpush1.bf16.msra.mxu0 %v773
  %1063 = vmatprep.subr.bf16.mxu0 %v778
  %1064 = vmatpush1.bf16.msra.mxu0 %v777
  %1065 = vmatprep.subr.bf16.mxu0 0
  %1066 = vmatpush1.bf16.msra.mxu0 0
  %1067 = vmatprep.subr.bf16.mxu0 0
  %1068 = vmatpush1.bf16.msra.mxu0 0
  %1069 = vmatprep.subr.bf16.mxu0 0
  %1070 = vmatpush1.bf16.msra.mxu0 0
  %1071 = vmatprep.subr.bf16.mxu0 0
  %1072 = vmatpush1.bf16.msra.mxu0 0
  %1073 = vmatprep.subr.bf16.mxu0 0
  %1074 = vmatpush1.bf16.msra.mxu0 0
  %1075 = vmatprep.subr.bf16.mxu0 0
  %1076 = vmatpush1.bf16.msra.mxu0 0
  %1077 = vmatprep.subr.bf16.mxu0 0
  %1078 = vmatpush1.bf16.msra.mxu0 0
  %1079 = vmatprep.subr.bf16.mxu0 0
  %1080 = vmatpush1.bf16.msra.mxu0 0
  %1081 = vmatprep.mubr.bf16.mxu0 0
  %1082 = vmatmul.mubr.bf16.gmra.mrb[0].mxu0 %v1048
  %v1083 = vpop.f32.mrb[0].mxu0
  %v1084 = vadd.f32 0.0, %v1083
  %v1085 = vpop.f32.mrb[0].mxu0
  %v1086 = vadd.f32 0.0, %v1085
  %v1087 = vpop.f32.mrb[0].mxu0
  %v1088 = vpop.f32.mrb[0].mxu0
  %1089 = vdwg.mxu0
  %1090 = vmatprep.subr.bf16.mxu0 %v752
  %1091 = vmatpush1.bf16.msra.mxu0 %v751
  %1092 = vmatprep.subr.bf16.mxu0 %v756
  %1093 = vmatpush1.bf16.msra.mxu0 %v755
  %1094 = vmatprep.subr.bf16.mxu0 %v760
  %1095 = vmatpush1.bf16.msra.mxu0 %v759
  %1096 = vmatprep.subr.bf16.mxu0 %v764
  %1097 = vmatpush1.bf16.msra.mxu0 %v763
  %1098 = vmatprep.subr.bf16.mxu0 %v768
  %1099 = vmatpush1.bf16.msra.mxu0 %v767
  %1100 = vmatprep.subr.bf16.mxu0 %v772
  %1101 = vmatpush1.bf16.msra.mxu0 %v771
  %1102 = vmatprep.subr.bf16.mxu0 %v776
  %1103 = vmatpush1.bf16.msra.mxu0 %v775
  %1104 = vmatprep.subr.bf16.mxu0 %v780
  %1105 = vmatpush1.bf16.msra.mxu0 %v779
  %1106 = vmatprep.subr.bf16.mxu0 0
  %1107 = vmatpush1.bf16.msra.mxu0 0
  %1108 = vmatprep.subr.bf16.mxu0 0
  %1109 = vmatpush1.bf16.msra.mxu0 0
  %1110 = vmatprep.subr.bf16.mxu0 0
  %1111 = vmatpush1.bf16.msra.mxu0 0
  %1112 = vmatprep.subr.bf16.mxu0 0
  %1113 = vmatpush1.bf16.msra.mxu0 0
  %1114 = vmatprep.subr.bf16.mxu0 0
  %1115 = vmatpush1.bf16.msra.mxu0 0
  %1116 = vmatprep.subr.bf16.mxu0 0
  %1117 = vmatpush1.bf16.msra.mxu0 0
  %1118 = vmatprep.subr.bf16.mxu0 0
  %1119 = vmatpush1.bf16.msra.mxu0 0
  %1120 = vmatprep.subr.bf16.mxu0 0
  %1121 = vmatpush1.bf16.msra.mxu0 0
  %1122 = vmatprep.mubr.bf16.mxu0 0
  %1123 = vmatmul.mubr.bf16.gmra.mrb[0].mxu0 %v1048
  %v1124 = vpop.f32.mrb[0].mxu0
  %v1125 = vadd.f32 0.0, %v1124
  %v1126 = vpop.f32.mrb[0].mxu0
  %v1127 = vadd.f32 0.0, %v1126
  %v1128 = vpop.f32.mrb[0].mxu0
  %v1129 = vpop.f32.mrb[0].mxu0
  %1130 = vdwg.mxu0
  %v1131 = vadd.f32 %v1044, %v1084
  %v1132 = vadd.f32 %v1045, %v1086
  %v1133 = vadd.f32 %v1046, %v1125
  %v1134 = vadd.f32 %v1047, %v1127
  %v1135 = vxor.u32 %v1131, 2147483648
  %v1136 = vmul.f32 %v1135, 1.442695
  %v1137 = vpow.pop %v1136
  %v1138 = vadd.f32 %v1137, 1.0
  %v1139 = vrcp.pop %v1138
  %v1140 = vmul.f32 1.0, %v1139
  %v1141 = vxor.u32 %v1132, 2147483648
  %v1142 = vmul.f32 %v1141, 1.442695
  %v1143 = vpow.pop %v1142
  %v1144 = vadd.f32 %v1143, 1.0
  %v1145 = vrcp.pop %v1144
  %v1146 = vmul.f32 1.0, %v1145
  %v1147 = vtanh.pop %v1133
  %v1148 = vxor.u32 %v1134, 2147483648
  %v1149 = vmul.f32 %v1148, 1.442695
  %v1150 = vpow.pop %v1149
  %v1151 = vadd.f32 %v1150, 1.0
  %v1152 = vrcp.pop %v1151
  %v1153 = vmul.f32 1.0, %v1152
  %v1154 = vmul.f32 %v1146, %v1038
  %v1155 = vmul.f32 %v1140, %v1147
  %v1156 = vadd.f32 %v1154, %v1155
  %v1157 = vtanh.pop %v1156
  %v1158 = vmul.f32 %v1153, %v1157
  %s1159 = smul.u32 3, 4
  %s1160 = smul.addr %s1159, 8
  %s1161 = scalar_lea.vmem [#allocation2], %s1160
  %v1162 = vld [vmem:[%s1161] sm:$0xff]
  %v1163 = vld [vmem:[%s1161 + $0x8] sm:$0xff]
  %v1164 = vld [vmem:[%s1161 + $0x10] sm:$0xff]
  %v1165 = vld [vmem:[%s1161 + $0x18] sm:$0xff]
  %v1166 = vpack.c.bf16 %v1158, %v1158
  %1167 = vmatprep.subr.bf16.mxu0 %v750
  %1168 = vmatpush1.bf16.msra.mxu0 %v749
  %1169 = vmatprep.subr.bf16.mxu0 %v754
  %1170 = vmatpush1.bf16.msra.mxu0 %v753
  %1171 = vmatprep.subr.bf16.mxu0 %v758
  %1172 = vmatpush1.bf16.msra.mxu0 %v757
  %1173 = vmatprep.subr.bf16.mxu0 %v762
  %1174 = vmatpush1.bf16.msra.mxu0 %v761
  %1175 = vmatprep.subr.bf16.mxu0 %v766
  %1176 = vmatpush1.bf16.msra.mxu0 %v765
  %1177 = vmatprep.subr.bf16.mxu0 %v770
  %1178 = vmatpush1.bf16.msra.mxu0 %v769
  %1179 = vmatprep.subr.bf16.mxu0 %v774
  %1180 = vmatpush1.bf16.msra.mxu0 %v773
  %1181 = vmatprep.subr.bf16.mxu0 %v778
  %1182 = vmatpush1.bf16.msra.mxu0 %v777
  %1183 = vmatprep.subr.bf16.mxu0 0
  %1184 = vmatpush1.bf16.msra.mxu0 0
  %1185 = vmatprep.subr.bf16.mxu0 0
  %1186 = vmatpush1.bf16.msra.mxu0 0
  %1187 = vmatprep.subr.bf16.mxu0 0
  %1188 = vmatpush1.bf16.msra.mxu0 0
  %1189 = vmatprep.subr.bf16.mxu0 0
  %1190 = vmatpush1.bf16.msra.mxu0 0
  %1191 = vmatprep.subr.bf16.mxu0 0
  %1192 = vmatpush1.bf16.msra.mxu0 0
  %1193 = vmatprep.subr.bf16.mxu0 0
  %1194 = vmatpush1.bf16.msra.mxu0 0
  %1195 = vmatprep.subr.bf16.mxu0 0
  %1196 = vmatpush1.bf16.msra.mxu0 0
  %1197 = vmatprep.subr.bf16.mxu0 0
  %1198 = vmatpush1.bf16.msra.mxu0 0
  %1199 = vmatprep.mubr.bf16.mxu0 0
  %1200 = vmatmul.mubr.bf16.gmra.mrb[0].mxu0 %v1166
  %v1201 = vpop.f32.mrb[0].mxu0
  %v1202 = vadd.f32 0.0, %v1201
  %v1203 = vpop.f32.mrb[0].mxu0
  %v1204 = vadd.f32 0.0, %v1203
  %v1205 = vpop.f32.mrb[0].mxu0
  %v1206 = vpop.f32.mrb[0].mxu0
  %1207 = vdwg.mxu0
  %1208 = vmatprep.subr.bf16.mxu0 %v752
  %1209 = vmatpush1.bf16.msra.mxu0 %v751
  %1210 = vmatprep.subr.bf16.mxu0 %v756
  %1211 = vmatpush1.bf16.msra.mxu0 %v755
  %1212 = vmatprep.subr.bf16.mxu0 %v760
  %1213 = vmatpush1.bf16.msra.mxu0 %v759
  %1214 = vmatprep.subr.bf16.mxu0 %v764
  %1215 = vmatpush1.bf16.msra.mxu0 %v763
  %1216 = vmatprep.subr.bf16.mxu0 %v768
  %1217 = vmatpush1.bf16.msra.mxu0 %v767
  %1218 = vmatprep.subr.bf16.mxu0 %v772
  %1219 = vmatpush1.bf16.msra.mxu0 %v771
  %1220 = vmatprep.subr.bf16.mxu0 %v776
  %1221 = vmatpush1.bf16.msra.mxu0 %v775
  %1222 = vmatprep.subr.bf16.mxu0 %v780
  %1223 = vmatpush1.bf16.msra.mxu0 %v779
  %1224 = vmatprep.subr.bf16.mxu0 0
  %1225 = vmatpush1.bf16.msra.mxu0 0
  %1226 = vmatprep.subr.bf16.mxu0 0
  %1227 = vmatpush1.bf16.msra.mxu0 0
  %1228 = vmatprep.subr.bf16.mxu0 0
  %1229 = vmatpush1.bf16.msra.mxu0 0
  %1230 = vmatprep.subr.bf16.mxu0 0
  %1231 = vmatpush1.bf16.msra.mxu0 0
  %1232 = vmatprep.subr.bf16.mxu0 0
  %1233 = vmatpush1.bf16.msra.mxu0 0
  %1234 = vmatprep.subr.bf16.mxu0 0
  %1235 = vmatpush1.bf16.msra.mxu0 0
  %1236 = vmatprep.subr.bf16.mxu0 0
  %1237 = vmatpush1.bf16.msra.mxu0 0
  %1238 = vmatprep.subr.bf16.mxu0 0
  %1239 = vmatpush1.bf16.msra.mxu0 0
  %1240 = vmatprep.mubr.bf16.mxu0 0
  %1241 = vmatmul.mubr.bf16.gmra.mrb[0].mxu0 %v1166
  %v1242 = vpop.f32.mrb[0].mxu0
  %v1243 = vadd.f32 0.0, %v1242
  %v1244 = vpop.f32.mrb[0].mxu0
  %v1245 = vadd.f32 0.0, %v1244
  %v1246 = vpop.f32.mrb[0].mxu0
  %v1247 = vpop.f32.mrb[0].mxu0
  %1248 = vdwg.mxu0
  %v1249 = vadd.f32 %v1162, %v1202
  %v1250 = vadd.f32 %v1163, %v1204
  %v1251 = vadd.f32 %v1164, %v1243
  %v1252 = vadd.f32 %v1165, %v1245
  %v1253 = vxor.u32 %v1249, 2147483648
  %v1254 = vmul.f32 %v1253, 1.442695
  %v1255 = vpow.pop %v1254
  %v1256 = vadd.f32 %v1255, 1.0
  %v1257 = vrcp.pop %v1256
  %v1258 = vmul.f32 1.0, %v1257
  %v1259 = vxor.u32 %v1250, 2147483648
  %v1260 = vmul.f32 %v1259, 1.442695
  %v1261 = vpow.pop %v1260
  %v1262 = vadd.f32 %v1261, 1.0
  %v1263 = vrcp.pop %v1262
  %v1264 = vmul.f32 1.0, %v1263
  %v1265 = vtanh.pop %v1251
  %v1266 = vxor.u32 %v1252, 2147483648
  %v1267 = vmul.f32 %v1266, 1.442695
  %v1268 = vpow.pop %v1267
  %v1269 = vadd.f32 %v1268, 1.0
  %v1270 = vrcp.pop %v1269
  %v1271 = vmul.f32 1.0, %v1270
  %v1272 = vmul.f32 %v1264, %v1156
  %v1273 = vmul.f32 %v1258, %v1265
  %v1274 = vadd.f32 %v1272, %v1273
  %v1275 = vtanh.pop %v1274
  %v1276 = vmul.f32 %v1271, %v1275
  %s1277 = smul.u32 4, 4
  %s1278 = smul.addr %s1277, 8
  %s1279 = scalar_lea.vmem [#allocation2], %s1278
  %v1280 = vld [vmem:[%s1279] sm:$0xff]
  %v1281 = vld [vmem:[%s1279 + $0x8] sm:$0xff]
  %v1282 = vld [vmem:[%s1279 + $0x10] sm:$0xff]
  %v1283 = vld [vmem:[%s1279 + $0x18] sm:$0xff]
  %v1284 = vpack.c.bf16 %v1276, %v1276
  %1285 = vmatprep.subr.bf16.mxu0 %v750
  %1286 = vmatpush1.bf16.msra.mxu0 %v749
  %1287 = vmatprep.subr.bf16.mxu0 %v754
  %1288 = vmatpush1.bf16.msra.mxu0 %v753
  %1289 = vmatprep.subr.bf16.mxu0 %v758
  %1290 = vmatpush1.bf16.msra.mxu0 %v757
  %1291 = vmatprep.subr.bf16.mxu0 %v762
  %1292 = vmatpush1.bf16.msra.mxu0 %v761
  %1293 = vmatprep.subr.bf16.mxu0 %v766
  %1294 = vmatpush1.bf16.msra.mxu0 %v765
  %1295 = vmatprep.subr.bf16.mxu0 %v770
  %1296 = vmatpush1.bf16.msra.mxu0 %v769
  %1297 = vmatprep.subr.bf16.mxu0 %v774
  %1298 = vmatpush1.bf16.msra.mxu0 %v773
  %1299 = vmatprep.subr.bf16.mxu0 %v778
  %1300 = vmatpush1.bf16.msra.mxu0 %v777
  %1301 = vmatprep.subr.bf16.mxu0 0
  %1302 = vmatpush1.bf16.msra.mxu0 0
  %1303 = vmatprep.subr.bf16.mxu0 0
  %1304 = vmatpush1.bf16.msra.mxu0 0
  %1305 = vmatprep.subr.bf16.mxu0 0
  %1306 = vmatpush1.bf16.msra.mxu0 0
  %1307 = vmatprep.subr.bf16.mxu0 0
  %1308 = vmatpush1.bf16.msra.mxu0 0
  %1309 = vmatprep.subr.bf16.mxu0 0
  %1310 = vmatpush1.bf16.msra.mxu0 0
  %1311 = vmatprep.subr.bf16.mxu0 0
  %1312 = vmatpush1.bf16.msra.mxu0 0
  %1313 = vmatprep.subr.bf16.mxu0 0
  %1314 = vmatpush1.bf16.msra.mxu0 0
  %1315 = vmatprep.subr.bf16.mxu0 0
  %1316 = vmatpush1.bf16.msra.mxu0 0
  %1317 = vmatprep.mubr.bf16.mxu0 0
  %1318 = vmatmul.mubr.bf16.gmra.mrb[0].mxu0 %v1284
  %v1319 = vpop.f32.mrb[0].mxu0
  %v1320 = vadd.f32 0.0, %v1319
  %v1321 = vpop.f32.mrb[0].mxu0
  %v1322 = vadd.f32 0.0, %v1321
  %v1323 = vpop.f32.mrb[0].mxu0
  %v1324 = vpop.f32.mrb[0].mxu0
  %1325 = vdwg.mxu0
  %1326 = vmatprep.subr.bf16.mxu0 %v752
  %1327 = vmatpush1.bf16.msra.mxu0 %v751
  %1328 = vmatprep.subr.bf16.mxu0 %v756
  %1329 = vmatpush1.bf16.msra.mxu0 %v755
  %1330 = vmatprep.subr.bf16.mxu0 %v760
  %1331 = vmatpush1.bf16.msra.mxu0 %v759
  %1332 = vmatprep.subr.bf16.mxu0 %v764
  %1333 = vmatpush1.bf16.msra.mxu0 %v763
  %1334 = vmatprep.subr.bf16.mxu0 %v768
  %1335 = vmatpush1.bf16.msra.mxu0 %v767
  %1336 = vmatprep.subr.bf16.mxu0 %v772
  %1337 = vmatpush1.bf16.msra.mxu0 %v771
  %1338 = vmatprep.subr.bf16.mxu0 %v776
  %1339 = vmatpush1.bf16.msra.mxu0 %v775
  %1340 = vmatprep.subr.bf16.mxu0 %v780
  %1341 = vmatpush1.bf16.msra.mxu0 %v779
  %1342 = vmatprep.subr.bf16.mxu0 0
  %1343 = vmatpush1.bf16.msra.mxu0 0
  %1344 = vmatprep.subr.bf16.mxu0 0
  %1345 = vmatpush1.bf16.msra.mxu0 0
  %1346 = vmatprep.subr.bf16.mxu0 0
  %1347 = vmatpush1.bf16.msra.mxu0 0
  %1348 = vmatprep.subr.bf16.mxu0 0
  %1349 = vmatpush1.bf16.msra.mxu0 0
  %1350 = vmatprep.subr.bf16.mxu0 0
  %1351 = vmatpush1.bf16.msra.mxu0 0
  %1352 = vmatprep.subr.bf16.mxu0 0
  %1353 = vmatpush1.bf16.msra.mxu0 0
  %1354 = vmatprep.subr.bf16.mxu0 0
  %1355 = vmatpush1.bf16.msra.mxu0 0
  %1356 = vmatprep.subr.bf16.mxu0 0
  %1357 = vmatpush1.bf16.msra.mxu0 0
  %1358 = vmatprep.mubr.bf16.mxu0 0
  %1359 = vmatmul.mubr.bf16.gmra.mrb[0].mxu0 %v1284
  %v1360 = vpop.f32.mrb[0].mxu0
  %v1361 = vadd.f32 0.0, %v1360
  %v1362 = vpop.f32.mrb[0].mxu0
  %v1363 = vadd.f32 0.0, %v1362
  %v1364 = vpop.f32.mrb[0].mxu0
  %v1365 = vpop.f32.mrb[0].mxu0
  %1366 = vdwg.mxu0
  %v1367 = vadd.f32 %v1280, %v1320
  %v1368 = vadd.f32 %v1281, %v1322
  %v1369 = vadd.f32 %v1282, %v1361
  %v1370 = vadd.f32 %v1283, %v1363
  %v1371 = vxor.u32 %v1367, 2147483648
  %v1372 = vmul.f32 %v1371, 1.442695
  %v1373 = vpow.pop %v1372
  %v1374 = vadd.f32 %v1373, 1.0
  %v1375 = vrcp.pop %v1374
  %v1376 = vmul.f32 1.0, %v1375
  %v1377 = vxor.u32 %v1368, 2147483648
  %v1378 = vmul.f32 %v1377, 1.442695
  %v1379 = vpow.pop %v1378
  %v1380 = vadd.f32 %v1379, 1.0
  %v1381 = vrcp.pop %v1380
  %v1382 = vmul.f32 1.0, %v1381
  %v1383 = vtanh.pop %v1369
  %v1384 = vxor.u32 %v1370, 2147483648
  %v1385 = vmul.f32 %v1384, 1.442695
  %v1386 = vpow.pop %v1385
  %v1387 = vadd.f32 %v1386, 1.0
  %v1388 = vrcp.pop %v1387
  %v1389 = vmul.f32 1.0, %v1388
  %v1390 = vmul.f32 %v1382, %v1274
  %v1391 = vmul.f32 %v1376, %v1383
  %v1392 = vadd.f32 %v1390, %v1391
  %v1393 = vtanh.pop %v1392
  %v1394 = vmul.f32 %v1389, %v1393
  %s1395 = smul.u32 5, 4
  %s1396 = smul.addr %s1395, 8
  %s1397 = scalar_lea.vmem [#allocation2], %s1396
  %v1398 = vld [vmem:[%s1397] sm:$0xff]
  %v1399 = vld [vmem:[%s1397 + $0x8] sm:$0xff]
  %v1400 = vld [vmem:[%s1397 + $0x10] sm:$0xff]
  %v1401 = vld [vmem:[%s1397 + $0x18] sm:$0xff]
  %v1402 = vpack.c.bf16 %v1394, %v1394
  %1403 = vmatprep.subr.bf16.mxu0 %v750
  %1404 = vmatpush1.bf16.msra.mxu0 %v749
  %1405 = vmatprep.subr.bf16.mxu0 %v754
  %1406 = vmatpush1.bf16.msra.mxu0 %v753
  %1407 = vmatprep.subr.bf16.mxu0 %v758
  %1408 = vmatpush1.bf16.msra.mxu0 %v757
  %1409 = vmatprep.subr.bf16.mxu0 %v762
  %1410 = vmatpush1.bf16.msra.mxu0 %v761
  %1411 = vmatprep.subr.bf16.mxu0 %v766
  %1412 = vmatpush1.bf16.msra.mxu0 %v765
  %1413 = vmatprep.subr.bf16.mxu0 %v770
  %1414 = vmatpush1.bf16.msra.mxu0 %v769
  %1415 = vmatprep.subr.bf16.mxu0 %v774
  %1416 = vmatpush1.bf16.msra.mxu0 %v773
  %1417 = vmatprep.subr.bf16.mxu0 %v778
  %1418 = vmatpush1.bf16.msra.mxu0 %v777
  %1419 = vmatprep.subr.bf16.mxu0 0
  %1420 = vmatpush1.bf16.msra.mxu0 0
  %1421 = vmatprep.subr.bf16.mxu0 0
  %1422 = vmatpush1.bf16.msra.mxu0 0
  %1423 = vmatprep.subr.bf16.mxu0 0
  %1424 = vmatpush1.bf16.msra.mxu0 0
  %1425 = vmatprep.subr.bf16.mxu0 0
  %1426 = vmatpush1.bf16.msra.mxu0 0
  %1427 = vmatprep.subr.bf16.mxu0 0
  %1428 = vmatpush1.bf16.msra.mxu0 0
  %1429 = vmatprep.subr.bf16.mxu0 0
  %1430 = vmatpush1.bf16.msra.mxu0 0
  %1431 = vmatprep.subr.bf16.mxu0 0
  %1432 = vmatpush1.bf16.msra.mxu0 0
  %1433 = vmatprep.subr.bf16.mxu0 0
  %1434 = vmatpush1.bf16.msra.mxu0 0
  %1435 = vmatprep.mubr.bf16.mxu0 0
  %1436 = vmatmul.mubr.bf16.gmra.mrb[0].mxu0 %v1402
  %v1437 = vpop.f32.mrb[0].mxu0
  %v1438 = vadd.f32 0.0, %v1437
  %v1439 = vpop.f32.mrb[0].mxu0
  %v1440 = vadd.f32 0.0, %v1439
  %v1441 = vpop.f32.mrb[0].mxu0
  %v1442 = vpop.f32.mrb[0].mxu0
  %1443 = vdwg.mxu0
  %1444 = vmatprep.subr.bf16.mxu0 %v752
  %1445 = vmatpush1.bf16.msra.mxu0 %v751
  %1446 = vmatprep.subr.bf16.mxu0 %v756
  %1447 = vmatpush1.bf16.msra.mxu0 %v755
  %1448 = vmatprep.subr.bf16.mxu0 %v760
  %1449 = vmatpush1.bf16.msra.mxu0 %v759
  %1450 = vmatprep.subr.bf16.mxu0 %v764
  %1451 = vmatpush1.bf16.msra.mxu0 %v763
  %1452 = vmatprep.subr.bf16.mxu0 %v768
  %1453 = vmatpush1.bf16.msra.mxu0 %v767
  %1454 = vmatprep.subr.bf16.mxu0 %v772
  %1455 = vmatpush1.bf16.msra.mxu0 %v771
  %1456 = vmatprep.subr.bf16.mxu0 %v776
  %1457 = vmatpush1.bf16.msra.mxu0 %v775
  %1458 = vmatprep.subr.bf16.mxu0 %v780
  %1459 = vmatpush1.bf16.msra.mxu0 %v779
  %1460 = vmatprep.subr.bf16.mxu0 0
  %1461 = vmatpush1.bf16.msra.mxu0 0
  %1462 = vmatprep.subr.bf16.mxu0 0
  %1463 = vmatpush1.bf16.msra.mxu0 0
  %1464 = vmatprep.subr.bf16.mxu0 0
  %1465 = vmatpush1.bf16.msra.mxu0 0
  %1466 = vmatprep.subr.bf16.mxu0 0
  %1467 = vmatpush1.bf16.msra.mxu0 0
  %1468 = vmatprep.subr.bf16.mxu0 0
  %1469 = vmatpush1.bf16.msra.mxu0 0
  %1470 = vmatprep.subr.bf16.mxu0 0
  %1471 = vmatpush1.bf16.msra.mxu0 0
  %1472 = vmatprep.subr.bf16.mxu0 0
  %1473 = vmatpush1.bf16.msra.mxu0 0
  %1474 = vmatprep.subr.bf16.mxu0 0
  %1475 = vmatpush1.bf16.msra.mxu0 0
  %1476 = vmatprep.mubr.bf16.mxu0 0
  %1477 = vmatmul.mubr.bf16.gmra.mrb[0].mxu0 %v1402
  %v1478 = vpop.f32.mrb[0].mxu0
  %v1479 = vadd.f32 0.0, %v1478
  %v1480 = vpop.f32.mrb[0].mxu0
  %v1481 = vadd.f32 0.0, %v1480
  %v1482 = vpop.f32.mrb[0].mxu0
  %v1483 = vpop.f32.mrb[0].mxu0
  %1484 = vdwg.mxu0
  %v1485 = vadd.f32 %v1398, %v1438
  %v1486 = vadd.f32 %v1399, %v1440
  %v1487 = vadd.f32 %v1400, %v1479
  %v1488 = vadd.f32 %v1401, %v1481
  %v1489 = vxor.u32 %v1485, 2147483648
  %v1490 = vmul.f32 %v1489, 1.442695
  %v1491 = vpow.pop %v1490
  %v1492 = vadd.f32 %v1491, 1.0
  %v1493 = vrcp.pop %v1492
  %v1494 = vmul.f32 1.0, %v1493
  %v1495 = vxor.u32 %v1486, 2147483648
  %v1496 = vmul.f32 %v1495, 1.442695
  %v1497 = vpow.pop %v1496
  %v1498 = vadd.f32 %v1497, 1.0
  %v1499 = vrcp.pop %v1498
  %v1500 = vmul.f32 1.0, %v1499
  %v1501 = vtanh.pop %v1487
  %v1502 = vxor.u32 %v1488, 2147483648
  %v1503 = vmul.f32 %v1502, 1.442695
  %v1504 = vpow.pop %v1503
  %v1505 = vadd.f32 %v1504, 1.0
  %v1506 = vrcp.pop %v1505
  %v1507 = vmul.f32 1.0, %v1506
  %v1508 = vmul.f32 %v1500, %v1392
  %v1509 = vmul.f32 %v1494, %v1501
  %v1510 = vadd.f32 %v1508, %v1509
  %v1511 = vtanh.pop %v1510
  %v1512 = vmul.f32 %v1507, %v1511
  %s1513 = smul.u32 6, 4
  %s1514 = smul.addr %s1513, 8
  %s1515 = scalar_lea.vmem [#allocation2], %s1514
  %v1516 = vld [vmem:[%s1515] sm:$0xff]
  %v1517 = vld [vmem:[%s1515 + $0x8] sm:$0xff]
  %v1518 = vld [vmem:[%s1515 + $0x10] sm:$0xff]
  %v1519 = vld [vmem:[%s1515 + $0x18] sm:$0xff]
  %v1520 = vpack.c.bf16 %v1512, %v1512
  %1521 = vmatprep.subr.bf16.mxu0 %v750
  %1522 = vmatpush1.bf16.msra.mxu0 %v749
  %1523 = vmatprep.subr.bf16.mxu0 %v754
  %1524 = vmatpush1.bf16.msra.mxu0 %v753
  %1525 = vmatprep.subr.bf16.mxu0 %v758
  %1526 = vmatpush1.bf16.msra.mxu0 %v757
  %1527 = vmatprep.subr.bf16.mxu0 %v762
  %1528 = vmatpush1.bf16.msra.mxu0 %v761
  %1529 = vmatprep.subr.bf16.mxu0 %v766
  %1530 = vmatpush1.bf16.msra.mxu0 %v765
  %1531 = vmatprep.subr.bf16.mxu0 %v770
  %1532 = vmatpush1.bf16.msra.mxu0 %v769
  %1533 = vmatprep.subr.bf16.mxu0 %v774
  %1534 = vmatpush1.bf16.msra.mxu0 %v773
  %1535 = vmatprep.subr.bf16.mxu0 %v778
  %1536 = vmatpush1.bf16.msra.mxu0 %v777
  %1537 = vmatprep.subr.bf16.mxu0 0
  %1538 = vmatpush1.bf16.msra.mxu0 0
  %1539 = vmatprep.subr.bf16.mxu0 0
  %1540 = vmatpush1.bf16.msra.mxu0 0
  %1541 = vmatprep.subr.bf16.mxu0 0
  %1542 = vmatpush1.bf16.msra.mxu0 0
  %1543 = vmatprep.subr.bf16.mxu0 0
  %1544 = vmatpush1.bf16.msra.mxu0 0
  %1545 = vmatprep.subr.bf16.mxu0 0
  %1546 = vmatpush1.bf16.msra.mxu0 0
  %1547 = vmatprep.subr.bf16.mxu0 0
  %1548 = vmatpush1.bf16.msra.mxu0 0
  %1549 = vmatprep.subr.bf16.mxu0 0
  %1550 = vmatpush1.bf16.msra.mxu0 0
  %1551 = vmatprep.subr.bf16.mxu0 0
  %1552 = vmatpush1.bf16.msra.mxu0 0
  %1553 = vmatprep.mubr.bf16.mxu0 0
  %1554 = vmatmul.mubr.bf16.gmra.mrb[0].mxu0 %v1520
  %v1555 = vpop.f32.mrb[0].mxu0
  %v1556 = vadd.f32 0.0, %v1555
  %v1557 = vpop.f32.mrb[0].mxu0
  %v1558 = vadd.f32 0.0, %v1557
  %v1559 = vpop.f32.mrb[0].mxu0
  %v1560 = vpop.f32.mrb[0].mxu0
  %1561 = vdwg.mxu0
  %1562 = vmatprep.subr.bf16.mxu0 %v752
  %1563 = vmatpush1.bf16.msra.mxu0 %v751
  %1564 = vmatprep.subr.bf16.mxu0 %v756
  %1565 = vmatpush1.bf16.msra.mxu0 %v755
  %1566 = vmatprep.subr.bf16.mxu0 %v760
  %1567 = vmatpush1.bf16.msra.mxu0 %v759
  %1568 = vmatprep.subr.bf16.mxu0 %v764
  %1569 = vmatpush1.bf16.msra.mxu0 %v763
  %1570 = vmatprep.subr.bf16.mxu0 %v768
  %1571 = vmatpush1.bf16.msra.mxu0 %v767
  %1572 = vmatprep.subr.bf16.mxu0 %v772
  %1573 = vmatpush1.bf16.msra.mxu0 %v771
  %1574 = vmatprep.subr.bf16.mxu0 %v776
  %1575 = vmatpush1.bf16.msra.mxu0 %v775
  %1576 = vmatprep.subr.bf16.mxu0 %v780
  %1577 = vmatpush1.bf16.msra.mxu0 %v779
  %1578 = vmatprep.subr.bf16.mxu0 0
  %1579 = vmatpush1.bf16.msra.mxu0 0
  %1580 = vmatprep.subr.bf16.mxu0 0
  %1581 = vmatpush1.bf16.msra.mxu0 0
  %1582 = vmatprep.subr.bf16.mxu0 0
  %1583 = vmatpush1.bf16.msra.mxu0 0
  %1584 = vmatprep.subr.bf16.mxu0 0
  %1585 = vmatpush1.bf16.msra.mxu0 0
  %1586 = vmatprep.subr.bf16.mxu0 0
  %1587 = vmatpush1.bf16.msra.mxu0 0
  %1588 = vmatprep.subr.bf16.mxu0 0
  %1589 = vmatpush1.bf16.msra.mxu0 0
  %1590 = vmatprep.subr.bf16.mxu0 0
  %1591 = vmatpush1.bf16.msra.mxu0 0
  %1592 = vmatprep.subr.bf16.mxu0 0
  %1593 = vmatpush1.bf16.msra.mxu0 0
  %1594 = vmatprep.mubr.bf16.mxu0 0
  %1595 = vmatmul.mubr.bf16.gmra.mrb[0].mxu0 %v1520
  %v1596 = vpop.f32.mrb[0].mxu0
  %v1597 = vadd.f32 0.0, %v1596
  %v1598 = vpop.f32.mrb[0].mxu0
  %v1599 = vadd.f32 0.0, %v1598
  %v1600 = vpop.f32.mrb[0].mxu0
  %v1601 = vpop.f32.mrb[0].mxu0
  %1602 = vdwg.mxu0
  %v1603 = vadd.f32 %v1516, %v1556
  %v1604 = vadd.f32 %v1517, %v1558
  %v1605 = vadd.f32 %v1518, %v1597
  %v1606 = vadd.f32 %v1519, %v1599
  %v1607 = vxor.u32 %v1603, 2147483648
  %v1608 = vmul.f32 %v1607, 1.442695
  %v1609 = vpow.pop %v1608
  %v1610 = vadd.f32 %v1609, 1.0
  %v1611 = vrcp.pop %v1610
  %v1612 = vmul.f32 1.0, %v1611
  %v1613 = vxor.u32 %v1604, 2147483648
  %v1614 = vmul.f32 %v1613, 1.442695
  %v1615 = vpow.pop %v1614
  %v1616 = vadd.f32 %v1615, 1.0
  %v1617 = vrcp.pop %v1616
  %v1618 = vmul.f32 1.0, %v1617
  %v1619 = vtanh.pop %v1605
  %v1620 = vxor.u32 %v1606, 2147483648
  %v1621 = vmul.f32 %v1620, 1.442695
  %v1622 = vpow.pop %v1621
  %v1623 = vadd.f32 %v1622, 1.0
  %v1624 = vrcp.pop %v1623
  %v1625 = vmul.f32 1.0, %v1624
  %v1626 = vmul.f32 %v1618, %v1510
  %v1627 = vmul.f32 %v1612, %v1619
  %v1628 = vadd.f32 %v1626, %v1627
  %v1629 = vtanh.pop %v1628
  %v1630 = vmul.f32 %v1625, %v1629
  %s1631 = smul.u32 7, 4
  %s1632 = smul.addr %s1631, 8
  %s1633 = scalar_lea.vmem [#allocation2], %s1632
  %v1634 = vld [vmem:[%s1633] sm:$0xff]
  %v1635 = vld [vmem:[%s1633 + $0x8] sm:$0xff]
  %v1636 = vld [vmem:[%s1633 + $0x10] sm:$0xff]
  %v1637 = vld [vmem:[%s1633 + $0x18] sm:$0xff]
  %v1638 = vpack.c.bf16 %v1630, %v1630
  %1639 = vmatprep.subr.bf16.mxu0 %v750
  %1640 = vmatpush1.bf16.msra.mxu0 %v749
  %1641 = vmatprep.subr.bf16.mxu0 %v754
  %1642 = vmatpush1.bf16.msra.mxu0 %v753
  %1643 = vmatprep.subr.bf16.mxu0 %v758
  %1644 = vmatpush1.bf16.msra.mxu0 %v757
  %1645 = vmatprep.subr.bf16.mxu0 %v762
  %1646 = vmatpush1.bf16.msra.mxu0 %v761
  %1647 = vmatprep.subr.bf16.mxu0 %v766
  %1648 = vmatpush1.bf16.msra.mxu0 %v765
  %1649 = vmatprep.subr.bf16.mxu0 %v770
  %1650 = vmatpush1.bf16.msra.mxu0 %v769
  %1651 = vmatprep.subr.bf16.mxu0 %v774
  %1652 = vmatpush1.bf16.msra.mxu0 %v773
  %1653 = vmatprep.subr.bf16.mxu0 %v778
  %1654 = vmatpush1.bf16.msra.mxu0 %v777
  %1655 = vmatprep.subr.bf16.mxu0 0
  %1656 = vmatpush1.bf16.msra.mxu0 0
  %1657 = vmatprep.subr.bf16.mxu0 0
  %1658 = vmatpush1.bf16.msra.mxu0 0
  %1659 = vmatprep.subr.bf16.mxu0 0
  %1660 = vmatpush1.bf16.msra.mxu0 0
  %1661 = vmatprep.subr.bf16.mxu0 0
  %1662 = vmatpush1.bf16.msra.mxu0 0
  %1663 = vmatprep.subr.bf16.mxu0 0
  %1664 = vmatpush1.bf16.msra.mxu0 0
  %1665 = vmatprep.subr.bf16.mxu0 0
  %1666 = vmatpush1.bf16.msra.mxu0 0
  %1667 = vmatprep.subr.bf16.mxu0 0
  %1668 = vmatpush1.bf16.msra.mxu0 0
  %1669 = vmatprep.subr.bf16.mxu0 0
  %1670 = vmatpush1.bf16.msra.mxu0 0
  %1671 = vmatprep.mubr.bf16.mxu0 0
  %1672 = vmatmul.mubr.bf16.gmra.mrb[0].mxu0 %v1638
  %v1673 = vpop.f32.mrb[0].mxu0
  %v1674 = vadd.f32 0.0, %v1673
  %v1675 = vpop.f32.mrb[0].mxu0
  %v1676 = vadd.f32 0.0, %v1675
  %v1677 = vpop.f32.mrb[0].mxu0
  %v1678 = vpop.f32.mrb[0].mxu0
  %1679 = vdwg.mxu0
  %1680 = vmatprep.subr.bf16.mxu0 %v752
  %1681 = vmatpush1.bf16.msra.mxu0 %v751
  %1682 = vmatprep.subr.bf16.mxu0 %v756
  %1683 = vmatpush1.bf16.msra.mxu0 %v755
  %1684 = vmatprep.subr.bf16.mxu0 %v760
  %1685 = vmatpush1.bf16.msra.mxu0 %v759
  %1686 = vmatprep.subr.bf16.mxu0 %v764
  %1687 = vmatpush1.bf16.msra.mxu0 %v763
  %1688 = vmatprep.subr.bf16.mxu0 %v768
  %1689 = vmatpush1.bf16.msra.mxu0 %v767
  %1690 = vmatprep.subr.bf16.mxu0 %v772
  %1691 = vmatpush1.bf16.msra.mxu0 %v771
  %1692 = vmatprep.subr.bf16.mxu0 %v776
  %1693 = vmatpush1.bf16.msra.mxu0 %v775
  %1694 = vmatprep.subr.bf16.mxu0 %v780
  %1695 = vmatpush1.bf16.msra.mxu0 %v779
  %1696 = vmatprep.subr.bf16.mxu0 0
  %1697 = vmatpush1.bf16.msra.mxu0 0
  %1698 = vmatprep.subr.bf16.mxu0 0
  %1699 = vmatpush1.bf16.msra.mxu0 0
  %1700 = vmatprep.subr.bf16.mxu0 0
  %1701 = vmatpush1.bf16.msra.mxu0 0
  %1702 = vmatprep.subr.bf16.mxu0 0
  %1703 = vmatpush1.bf16.msra.mxu0 0
  %1704 = vmatprep.subr.bf16.mxu0 0
  %1705 = vmatpush1.bf16.msra.mxu0 0
  %1706 = vmatprep.subr.bf16.mxu0 0
  %1707 = vmatpush1.bf16.msra.mxu0 0
  %1708 = vmatprep.subr.bf16.mxu0 0
  %1709 = vmatpush1.bf16.msra.mxu0 0
  %1710 = vmatprep.subr.bf16.mxu0 0
  %1711 = vmatpush1.bf16.msra.mxu0 0
  %1712 = vmatprep.mubr.bf16.mxu0 0
  %1713 = vmatmul.mubr.bf16.gmra.mrb[0].mxu0 %v1638
  %v1714 = vpop.f32.mrb[0].mxu0
  %v1715 = vadd.f32 0.0, %v1714
  %v1716 = vpop.f32.mrb[0].mxu0
  %v1717 = vadd.f32 0.0, %v1716
  %v1718 = vpop.f32.mrb[0].mxu0
  %v1719 = vpop.f32.mrb[0].mxu0
  %1720 = vdwg.mxu0
  %v1721 = vadd.f32 %v1634, %v1674
  %v1722 = vadd.f32 %v1635, %v1676
  %v1723 = vadd.f32 %v1636, %v1715
  %v1724 = vadd.f32 %v1637, %v1717
  %v1725 = vxor.u32 %v1721, 2147483648
  %v1726 = vmul.f32 %v1725, 1.442695
  %v1727 = vpow.pop %v1726
  %v1728 = vadd.f32 %v1727, 1.0
  %v1729 = vrcp.pop %v1728
  %v1730 = vmul.f32 1.0, %v1729
  %v1731 = vxor.u32 %v1722, 2147483648
  %v1732 = vmul.f32 %v1731, 1.442695
  %v1733 = vpow.pop %v1732
  %v1734 = vadd.f32 %v1733, 1.0
  %v1735 = vrcp.pop %v1734
  %v1736 = vmul.f32 1.0, %v1735
  %v1737 = vtanh.pop %v1723
  %v1738 = vxor.u32 %v1724, 2147483648
  %v1739 = vmul.f32 %v1738, 1.442695
  %v1740 = vpow.pop %v1739
  %v1741 = vadd.f32 %v1740, 1.0
  %v1742 = vrcp.pop %v1741
  %v1743 = vmul.f32 1.0, %v1742
  %v1744 = vmul.f32 %v1736, %v1628
  %v1745 = vmul.f32 %v1730, %v1737
  %v1746 = vadd.f32 %v1744, %v1745
  %v1747 = vtanh.pop %v1746
  %v1748 = vmul.f32 %v1743, %v1747
  %v1749 = vld [vmem:[%s5] sm:$0x1]
  %v1751 = vlaneseq
  %v1752 = vshrl.u32 %v1751, 7
  %v1753 = vsub.s32 0, %v1752
  %v1754 = vrot.slane %v1749, %v1753
  %v1756 = vmul.f32 %v1748, %v1754
  %1757 = vadd.xlane.f32.xlu0 %v1756
  %v1758 = vpop.xlane.xlu0 %1757
  %v1759 = vld [vmem:[%s6] sm:$0x1]
  %v1761 = vlaneseq
  %v1762 = vshrl.u32 %v1761, 7
  %v1763 = vsub.s32 0, %v1762
  %v1764 = vrot.slane %v1759, %v1763
  %v1766 = vadd.f32 %v1758, %v1764
  %1767 = vst [vmem:[%s7] sm:$0xff] %v1766
  // Predicated region
  $region30: #{simple_value_network.1} parent=0 // pred_check
    _
  $region31: #{simple_value_network.1} parent=0 // pred_check_branch
    %1769 = sbr.rel (0) target = $region33
  $region32: #{simple_value_network.1} parent=0 // pred_region
    _
  $region33: #{simple_value_network.1} parent=0 // pred_fallthru
    _
  // Predicated region
  $region34: #{simple_value_network.1} parent=0 // pred_check
    _
  $region35: #{simple_value_network.1} parent=0 // pred_check_branch
    %1771 = sbr.rel (0) target = $region37
  $region36: #{simple_value_network.1} parent=0 // pred_region
    _
  $region37: #{simple_value_network.1} parent=0 // pred_fallthru
    _

</llo_original>
